<compile_context>
chip_gen: v7x
topology: tpu7x:2x2x1
jax: 0.10.0
libtpu: 0.0.40
codegen_flags: <defaults>
</compile_context>

<pallas_src>
import functools

import jax
import jax.numpy as jnp
from jax.experimental import pallas as pl
from jax.experimental.pallas import tpu as pltpu


def _round_up(x, m):
    return ((x + m - 1) // m) * m


# ---------------------------------------------------------------------------
# Fused kernel: whole encoder+decoder stack for one (batch row, time tile).
# ---------------------------------------------------------------------------
def _fused_tcn_kernel(x_ref, wc_ref, bc_ref, wd_ref, bd_ref, o_ref, hist_ref,
                      *, block_meta, c_pad, c_out, tl):
    """block_meta: static tuple of (dilation, downsample_index or None) per TemporalBlock.

    x_ref   : (1, c_pad, tl) f32      channel-padded input tile (time on lanes)
    wc_ref  : (2*n_blocks, c_pad, 2*c_pad) bf16  fused K=2 conv weights
    bc_ref  : (2*n_blocks, c_pad, 1)  f32
    wd_ref  : (n_ds, c_pad, c_pad)    bf16       1x1 downsample weights
    bd_ref  : (n_ds, c_pad, 1)        f32
    hist_ref: (2*n_blocks, c_pad, tl) f32 scratch; per conv only lanes [0, d) are ever
              written/read (the last d time-steps of the previous tile's input stream).
    """
    t = pl.program_id(1)
    n_convs = 2 * len(block_meta)
    max_d = max(d for d, _ in block_meta)

    # t == 0  <=>  causal left zero-padding for every conv in the stack.
    @pl.when(t == 0)
    def _():
        hist_ref[:, :, pl.ds(0, max_d)] = jnp.zeros((n_convs, c_pad, max_d), jnp.float32)

    cur = x_ref[0]                                                  # (c_pad, tl) f32
    lane = jax.lax.broadcasted_iota(jnp.int32, (c_pad, tl), 1)      # hoisted, built once

    def causal_conv(inp, ci, d):
        # shifted[:, l] = stream[:, l - d]: lanes >= d from this tile (XLU lane roll),
        # lanes < d from the previous tile's history scratch.
        rolled = pltpu.roll(inp, shift=d, axis=1)
        prev = hist_ref[ci]                                          # only lanes < d used
        shifted = jnp.where(lane < d, prev, rolled)
        # Trimmed history store: only the d lanes the next tile will need.
        hist_ref[ci, :, pl.ds(0, d)] = inp[:, tl - d:]
        # Fused K=2 taps: one MXU matmul over the stacked contraction axis.
        z = jnp.concatenate([shifted, inp], axis=0)                  # (2*c_pad, tl)
        return (jnp.dot(wc_ref[ci], z.astype(jnp.bfloat16),
                        preferred_element_type=jnp.float32) + bc_ref[ci])

    for bi, (d, ds_idx) in enumerate(block_meta):
        h1 = jnp.maximum(causal_conv(cur, 2 * bi, d), 0.0)
        # TODO(synk): nn.Dropout(p=0.1) is identity here (inference semantics).
        h2 = jnp.maximum(causal_conv(h1, 2 * bi + 1, d), 0.0)
        if ds_idx is not None:
            res = (jnp.dot(wd_ref[ds_idx], cur.astype(jnp.bfloat16),
                           preferred_element_type=jnp.float32) + bd_ref[ds_idx])
        else:
            res = cur                                                # identity residual stays f32
        cur = jnp.maximum(h2 + res, 0.0)

    o_ref[0] = cur[:c_out, :].astype(o_ref.dtype)


# ---------------------------------------------------------------------------
# Weight packing: few stacked, channel-padded operands (zero-padding keeps the
# padded channel rows exactly zero through the whole stack).
# ---------------------------------------------------------------------------
def _pack_params(blocks, c_in):
    n_blocks = len(blocks)
    chans_in, chans_out = [], []
    cin = c_in
    for p, _ in blocks:
        cout = p["wa1"].shape[0]
        chans_in.append(cin)
        chans_out.append(cout)
        cin = cout
    c_pad = max(8, _round_up(max([c_in] + chans_out), 8))

    w_conv = jnp.zeros((2 * n_blocks, c_pad, 2 * c_pad), jnp.float32)
    b_conv = jnp.zeros((2 * n_blocks, c_pad, 1), jnp.float32)
    ds_w, ds_b = [], []
    block_meta = []
    for bi, (p, d) in enumerate(blocks):
        ci, co = chans_in[bi], chans_out[bi]
        # cols [0, c_pad) act on the dilation-shifted stream (tap t-d),
        # cols [c_pad, 2*c_pad) on the current stream (tap t).
        w_conv = w_conv.at[2 * bi, :co, :ci].set(p["wa1"])
        w_conv = w_conv.at[2 * bi, :co, c_pad:c_pad + ci].set(p["wb1"])
        b_conv = b_conv.at[2 * bi, :co, 0].set(p["b1"])
        w_conv = w_conv.at[2 * bi + 1, :co, :co].set(p["wa2"])
        w_conv = w_conv.at[2 * bi + 1, :co, c_pad:c_pad + co].set(p["wb2"])
        b_conv = b_conv.at[2 * bi + 1, :co, 0].set(p["b2"])
        if "wd" in p:
            ds_w.append(jnp.zeros((c_pad, c_pad), jnp.float32).at[:co, :ci].set(p["wd"]))
            ds_b.append(jnp.zeros((c_pad, 1), jnp.float32).at[:co, 0].set(p["bd"]))
            block_meta.append((d, len(ds_w) - 1))
        else:
            block_meta.append((d, None))
    if ds_w:
        w_ds, b_ds = jnp.stack(ds_w), jnp.stack(ds_b)
    else:  # dummy (never read) so pallas_call never sees a zero-sized operand
        w_ds = jnp.zeros((1, c_pad, c_pad), jnp.float32)
        b_ds = jnp.zeros((1, c_pad, 1), jnp.float32)
    return (w_conv.astype(jnp.bfloat16), b_conv, w_ds.astype(jnp.bfloat16), b_ds,
            tuple(block_meta), c_pad, chans_out[-1])


def _pick_time_tile(L, max_d, max_tile=2048):
    """Largest lane-aligned tile <= max_tile dividing L; prefer multiples of 256
    (full MXU width on v6e/v7x), else 128; otherwise fall back to full L."""
    if L <= max_tile:
        return L
    for step in (256, 128):
        if L % step:
            continue
        cand = (max_tile // step) * step
        while cand >= step:
            if L % cand == 0 and cand >= max_d:
                return cand
            cand -= step
    return L


# ---------------------------------------------------------------------------
# Wrapper: one pallas_call for the whole stack.
# ---------------------------------------------------------------------------
def tcn_autoencoder_forward(x_ncl, blocks, *, time_tile=None):
    """x_ncl: (B, C_in, L) float32 (torch NCL). blocks: list of (params, dilation).
    Returns (B, C_out, L) float32."""
    B, C0, L = x_ncl.shape
    w_conv, b_conv, w_ds, b_ds, block_meta, c_pad, c_out = _pack_params(blocks, C0)
    n_convs = w_conv.shape[0]
    max_d = max(d for d, _ in block_meta)

    TL = _pick_time_tile(L, max_d) if time_tile is None else time_tile
    assert L % TL == 0, (L, TL)
    assert TL % 128 == 0 or TL == L, (L, TL)          # lane-dense blocks
    assert TL >= max_d, "time tile must cover the largest dilation"
    n_t = L // TL

    # Channel-pad the input once in the wrapper (tiny) so the kernel sees a uniform
    # (c_pad, TL) tile and never needs unaligned sublane padding.
    x_pad = x_ncl.astype(jnp.float32)
    if C0 < c_pad:
        x_pad = jnp.pad(x_pad, ((0, 0), (0, c_pad - C0), (0, 0)))

    kern = functools.partial(_fused_tcn_kernel, block_meta=block_meta,
                             c_pad=c_pad, c_out=c_out, tl=TL)

    # Explicit VMEM budget: double-buffered I/O tiles + resident weights + history
    # scratch, with generous margin; stays well under v7x's 64 MiB physical VMEM.
    est = (2 * c_pad * TL * 4 + 2 * c_out * TL * 4
           + 2 * (w_conv.size * 2 + b_conv.size * 4 + w_ds.size * 2 + b_ds.size * 4)
           + n_convs * c_pad * TL * 4)
    vmem_limit = int(min(max(3 * est, 16 << 20), 48 << 20))

    out = pl.pallas_call(
        kern,
        out_shape=jax.ShapeDtypeStruct((B, c_out, L), jnp.float32),
        grid=(B, n_t),
        in_specs=[
            pl.BlockSpec((1, c_pad, TL), lambda b, t: (b, 0, t)),
            # Tiny packed weights: constant block index -> fully VMEM-resident.
            pl.BlockSpec(w_conv.shape, lambda b, t: (0, 0, 0)),
            pl.BlockSpec(b_conv.shape, lambda b, t: (0, 0, 0)),
            pl.BlockSpec(w_ds.shape, lambda b, t: (0, 0, 0)),
            pl.BlockSpec(b_ds.shape, lambda b, t: (0, 0, 0)),
        ],
        out_specs=pl.BlockSpec((1, c_out, TL), lambda b, t: (b, 0, t)),
        scratch_shapes=[pltpu.VMEM((n_convs, c_pad, TL), jnp.float32)],
        compiler_params=pltpu.CompilerParams(
            # Batch megacore-shardable; time carries the causal history -> sequential.
            # TODO(synk): for B == 1 on v7x, split the time axis across the 2 cores and
            # recompute the max_d-lane causal seam per core instead.
            dimension_semantics=("parallel", "arbitrary"),
            vmem_limit_bytes=vmem_limit,
        ),
    )(x_pad, w_conv, b_conv, w_ds, b_ds)
    return out


# ---------------------------------------------------------------------------
# Parameter init (deterministic, mirrors Conv1d shapes; weights N(0, 0.01)).
# Torch Conv1d weight (Cout, Cin, K=2) stored per tap in (Cout, Cin) orientation:
#   waX = weight[:, :, 0]  (tap at t - dilation),  wbX = weight[:, :, 1]  (tap at t)
# ---------------------------------------------------------------------------
def init_tcn_params(key, num_inputs, num_channels):
    blocks = []
    cin = num_inputs
    for i, cout in enumerate(num_channels):
        dilation = 2 ** i
        key, *ks = jax.random.split(key, 9)
        p = {
            "wa1": 0.01 * jax.random.normal(ks[0], (cout, cin), jnp.float32),
            "wb1": 0.01 * jax.random.normal(ks[1], (cout, cin), jnp.float32),
            "b1": 0.05 * jax.random.normal(ks[2], (cout,), jnp.float32),
            "wa2": 0.01 * jax.random.normal(ks[3], (cout, cout), jnp.float32),
            "wb2": 0.01 * jax.random.normal(ks[4], (cout, cout), jnp.float32),
            "b2": 0.05 * jax.random.normal(ks[5], (cout,), jnp.float32),
        }
        if cin != cout:  # downsample 1x1 conv only when channel counts differ
            p["wd"] = 0.01 * jax.random.normal(ks[6], (cout, cin), jnp.float32)
            p["bd"] = 0.05 * jax.random.normal(ks[7], (cout,), jnp.float32)
        blocks.append((p, dilation))
        cin = cout
    return blocks, key


# ---------------------------------------------------------------------------
# Pure-JAX f32 reference (same math, NCL layout) for the correctness check.
# ---------------------------------------------------------------------------
def _causal_conv_ref(x, wa, wb, b, d):
    L = x.shape[-1]
    shifted = jnp.pad(x, ((0, 0), (0, 0), (d, 0)))[:, :, :L]
    return (jnp.einsum("oc,bcl->bol", wb, x)
            + jnp.einsum("oc,bcl->bol", wa, shifted) + b[None, :, None])


def _block_ref(x, p, d):
    h1 = jnp.maximum(_causal_conv_ref(x, p["wa1"], p["wb1"], p["b1"], d), 0.0)
    h2 = jnp.maximum(_causal_conv_ref(h1, p["wa2"], p["wb2"], p["b2"], d), 0.0)
    if "wd" in p:
        res = jnp.einsum("oc,bcl->bol", p["wd"], x) + p["bd"][None, :, None]
    else:
        res = x
    return jnp.maximum(h2 + res, 0.0)


def tcn_autoencoder_ref(x_ncl, blocks):
    x = x_ncl
    for p, d in blocks:
        x = _block_ref(x, p, d)
    return x


if __name__ == "__main__":
    B, C_IN, L = 2, 4, 256
    encoder_channels = [8, 16]
    decoder_channels = [8, 4]   # reconstruct back to input_size channels

    key = jax.random.PRNGKey(0)
    key, xkey = jax.random.split(key)
    x = jax.random.normal(xkey, (B, C_IN, L), jnp.float32)   # NCL, like torch

    enc_blocks, key = init_tcn_params(key, C_IN, encoder_channels)
    dec_blocks, key = init_tcn_params(key, encoder_channels[-1], decoder_channels)
    blocks = enc_blocks + dec_blocks

    # time_tile=128 -> two time tiles per batch row, exercising the cross-tile causal
    # history seam (lane-aligned tiles; production picks multiples of 256 when L allows).
    out = tcn_autoencoder_forward(x, blocks, time_tile=128)
    out = jax.block_until_ready(out)

    ref = tcn_autoencoder_ref(x, blocks)
    assert out.shape == (B, decoder_channels[-1], L), out.shape
    # bf16 MXU operands (f32 accumulation) -> looser tolerance vs. the pure-f32 reference.
    max_err = float(jnp.max(jnp.abs(out - ref)))
    assert jnp.allclose(out, ref, atol=2e-2, rtol=2e-2), max_err

    print("KERNEL_OK")
</pallas_src>

<mosaic_0001>
module attributes {stable_mosaic.version = 11 : i64} {
  func.func @_fused_tcn_kernel(%arg0: i32, %arg1: i32, %arg2: memref<1x16x128xf32, #tpu.memory_space<vmem>>, %arg3: memref<8x16x32xbf16, #tpu.memory_space<vmem>>, %arg4: memref<8x16x1xf32, #tpu.memory_space<vmem>>, %arg5: memref<4x16x16xbf16, #tpu.memory_space<vmem>>, %arg6: memref<4x16x1xf32, #tpu.memory_space<vmem>>, %arg7: memref<1x4x128xf32, #tpu.memory_space<vmem>>, %arg8: memref<8x16x128xf32, #tpu.memory_space<vmem>>) attributes {dimension_semantics = [#tpu.dimension_semantics<parallel>, #tpu.dimension_semantics<arbitrary>], iteration_bounds = array<i64: 2, 2>, scalar_prefetch = 0 : i64, scratch_operands = 1 : i64, tpu.core_type = #tpu.core_type<tc>, window_params = [{transform_indices = @transform_0, window_bounds = array<i64: 1, 16, 128>}, {pipeline_mode = #tpu.pipeline_mode<synchronous>, transform_indices = @transform_1, window_bounds = array<i64: 8, 16, 32>}, {pipeline_mode = #tpu.pipeline_mode<synchronous>, transform_indices = @transform_2, window_bounds = array<i64: 8, 16, 1>}, {pipeline_mode = #tpu.pipeline_mode<synchronous>, transform_indices = @transform_3, window_bounds = array<i64: 4, 16, 16>}, {pipeline_mode = #tpu.pipeline_mode<synchronous>, transform_indices = @transform_4, window_bounds = array<i64: 4, 16, 1>}, {transform_indices = @transform_5, window_bounds = array<i64: 1, 4, 128>}]} {
    %c0_i32 = arith.constant 0 : i32
    %0 = arith.cmpi eq, %arg1, %c0_i32 : i32
    %1 = arith.extui %0 : i1 to i32
    %c0_i32_0 = arith.constant 0 : i32
    %2 = arith.cmpi ne, %1, %c0_i32_0 : i32
    scf.if %2 {
      %cst_156 = arith.constant 0.000000e+00 : f32
      %222 = vector.broadcast %cst_156 : f32 to vector<8x16x2xf32>
      %c0_157 = arith.constant 0 : index
      %c0_158 = arith.constant 0 : index
      %c0_159 = arith.constant 0 : index
      %223 = vector.load %arg8[%c0_157, %c0_158, %c0_159] : memref<8x16x128xf32, #tpu.memory_space<vmem>>, vector<8x16x2xf32>
      tpu.vector_store %arg8[%c0_157, %c0_158, %c0_159], %222 {strides = array<i32>} : memref<8x16x128xf32, #tpu.memory_space<vmem>>, vector<8x16x2xf32>,
    } else {
    }
    %c0 = arith.constant 0 : index
    %c0_1 = arith.constant 0 : index
    %c0_2 = arith.constant 0 : index
    %3 = vector.load %arg2[%c0, %c0_1, %c0_2] : memref<1x16x128xf32, #tpu.memory_space<vmem>>, vector<1x16x128xf32>
    %4 = vector.shape_cast %3 : vector<1x16x128xf32> to vector<16x128xf32>
    %5 = tpu.iota {dimensions = array<i32: 1>} : vector<16x128xi32>
    %c1_i32 = arith.constant 1 : i32
    %6 = tpu.dynamic_rotate %4 by %c1_i32 dim 1 : vector<16x128xf32>, i32 -> vector<16x128xf32>
    %c0_3 = arith.constant 0 : index
    %c0_4 = arith.constant 0 : index
    %c0_5 = arith.constant 0 : index
    %7 = vector.load %arg8[%c0_3, %c0_4, %c0_5] : memref<8x16x128xf32, #tpu.memory_space<vmem>>, vector<1x16x128xf32>
    %8 = vector.shape_cast %7 : vector<1x16x128xf32> to vector<16x128xf32>
    %c1_i32_6 = arith.constant 1 : i32
    %9 = vector.broadcast %c1_i32_6 : i32 to vector<16x128xi32>
    %10 = arith.cmpi slt, %5, %9 : vector<16x128xi32>
    %11 = arith.select %10, %8, %6 : vector<16x128xi1>, vector<16x128xf32>
    %12 = vector.extract_strided_slice %4 {offsets = [0, 127], sizes = [16, 1], strides = [1, 1]} : vector<16x128xf32> to vector<16x1xf32>
    %c0_7 = arith.constant 0 : index
    %c0_8 = arith.constant 0 : index
    %c0_9 = arith.constant 0 : index
    %13 = vector.load %arg8[%c0_7, %c0_8, %c0_9] : memref<8x16x128xf32, #tpu.memory_space<vmem>>, vector<1x16x1xf32>
    %14 = vector.shape_cast %13 : vector<1x16x1xf32> to vector<16x1xf32>
    %15 = vector.shape_cast %12 : vector<16x1xf32> to vector<1x16x1xf32>
    tpu.vector_store %arg8[%c0_7, %c0_8, %c0_9], %15 {strides = array<i32>} : memref<8x16x128xf32, #tpu.memory_space<vmem>>, vector<1x16x1xf32>,
    %16 = tpu.concatenate %11, %4 in 0 : vector<16x128xf32>, vector<16x128xf32> -> vector<32x128xf32>
    %c0_10 = arith.constant 0 : index
    %c0_11 = arith.constant 0 : index
    %c0_12 = arith.constant 0 : index
    %17 = vector.load %arg3[%c0_10, %c0_11, %c0_12] : memref<8x16x32xbf16, #tpu.memory_space<vmem>>, vector<1x16x32xbf16>
    %18 = vector.shape_cast %17 : vector<1x16x32xbf16> to vector<16x32xbf16>
    %19 = arith.truncf %16 : vector<32x128xf32> to vector<32x128xbf16>
    %cst = arith.constant dense<0.000000e+00> : vector<16x128xf32>
    %20 = tpu.matmul %18, %19, %cst {dimension_numbers = #tpu.dot_dimension_numbers<[1], [0], [0], [1], [0, 0, 1, 1], [], []>} : vector<16x32xbf16>, vector<32x128xbf16>, vector<16x128xf32> -> vector<16x128xf32>
    %c0_13 = arith.constant 0 : index
    %c0_14 = arith.constant 0 : index
    %c0_15 = arith.constant 0 : index
    %21 = vector.load %arg4[%c0_13, %c0_14, %c0_15] : memref<8x16x1xf32, #tpu.memory_space<vmem>>, vector<1x16x1xf32>
    %22 = vector.shape_cast %21 : vector<1x16x1xf32> to vector<16x1xf32>
    %23 = vector.broadcast %22 : vector<16x1xf32> to vector<16x128xf32>
    %24 = arith.addf %20, %23 : vector<16x128xf32>
    %cst_16 = arith.constant 0.000000e+00 : f32
    %25 = vector.broadcast %cst_16 : f32 to vector<16x128xf32>
    %26 = arith.maximumf %24, %25 : vector<16x128xf32>
    %c1_i32_17 = arith.constant 1 : i32
    %27 = tpu.dynamic_rotate %26 by %c1_i32_17 dim 1 : vector<16x128xf32>, i32 -> vector<16x128xf32>
    %c1 = arith.constant 1 : index
    %c0_18 = arith.constant 0 : index
    %c0_19 = arith.constant 0 : index
    %28 = vector.load %arg8[%c1, %c0_18, %c0_19] : memref<8x16x128xf32, #tpu.memory_space<vmem>>, vector<1x16x128xf32>
    %29 = vector.shape_cast %28 : vector<1x16x128xf32> to vector<16x128xf32>
    %c1_i32_20 = arith.constant 1 : i32
    %30 = vector.broadcast %c1_i32_20 : i32 to vector<16x128xi32>
    %31 = arith.cmpi slt, %5, %30 : vector<16x128xi32>
    %32 = arith.select %31, %29, %27 : vector<16x128xi1>, vector<16x128xf32>
    %33 = vector.extract_strided_slice %26 {offsets = [0, 127], sizes = [16, 1], strides = [1, 1]} : vector<16x128xf32> to vector<16x1xf32>
    %c1_21 = arith.constant 1 : index
    %c0_22 = arith.constant 0 : index
    %c0_23 = arith.constant 0 : index
    %34 = vector.load %arg8[%c1_21, %c0_22, %c0_23] : memref<8x16x128xf32, #tpu.memory_space<vmem>>, vector<1x16x1xf32>
    %35 = vector.shape_cast %34 : vector<1x16x1xf32> to vector<16x1xf32>
    %36 = vector.shape_cast %33 : vector<16x1xf32> to vector<1x16x1xf32>
    tpu.vector_store %arg8[%c1_21, %c0_22, %c0_23], %36 {strides = array<i32>} : memref<8x16x128xf32, #tpu.memory_space<vmem>>, vector<1x16x1xf32>,
    %37 = tpu.concatenate %32, %26 in 0 : vector<16x128xf32>, vector<16x128xf32> -> vector<32x128xf32>
    %c1_24 = arith.constant 1 : index
    %c0_25 = arith.constant 0 : index
    %c0_26 = arith.constant 0 : index
    %38 = vector.load %arg3[%c1_24, %c0_25, %c0_26] : memref<8x16x32xbf16, #tpu.memory_space<vmem>>, vector<1x16x32xbf16>
    %39 = vector.shape_cast %38 : vector<1x16x32xbf16> to vector<16x32xbf16>
    %40 = arith.truncf %37 : vector<32x128xf32> to vector<32x128xbf16>
    %cst_27 = arith.constant dense<0.000000e+00> : vector<16x128xf32>
    %41 = tpu.matmul %39, %40, %cst_27 {dimension_numbers = #tpu.dot_dimension_numbers<[1], [0], [0], [1], [0, 0, 1, 1], [], []>} : vector<16x32xbf16>, vector<32x128xbf16>, vector<16x128xf32> -> vector<16x128xf32>
    %c1_28 = arith.constant 1 : index
    %c0_29 = arith.constant 0 : index
    %c0_30 = arith.constant 0 : index
    %42 = vector.load %arg4[%c1_28, %c0_29, %c0_30] : memref<8x16x1xf32, #tpu.memory_space<vmem>>, vector<1x16x1xf32>
    %43 = vector.shape_cast %42 : vector<1x16x1xf32> to vector<16x1xf32>
    %44 = vector.broadcast %43 : vector<16x1xf32> to vector<16x128xf32>
    %45 = arith.addf %41, %44 : vector<16x128xf32>
    %cst_31 = arith.constant 0.000000e+00 : f32
    %46 = vector.broadcast %cst_31 : f32 to vector<16x128xf32>
    %47 = arith.maximumf %45, %46 : vector<16x128xf32>
    %c0_32 = arith.constant 0 : index
    %c0_33 = arith.constant 0 : index
    %c0_34 = arith.constant 0 : index
    %48 = vector.load %arg5[%c0_32, %c0_33, %c0_34] : memref<4x16x16xbf16, #tpu.memory_space<vmem>>, vector<1x16x16xbf16>
    %49 = vector.shape_cast %48 : vector<1x16x16xbf16> to vector<16x16xbf16>
    %50 = arith.truncf %4 : vector<16x128xf32> to vector<16x128xbf16>
    %cst_35 = arith.constant dense<0.000000e+00> : vector<16x128xf32>
    %51 = tpu.matmul %49, %50, %cst_35 {dimension_numbers = #tpu.dot_dimension_numbers<[1], [0], [0], [1], [0, 0, 1, 1], [], []>} : vector<16x16xbf16>, vector<16x128xbf16>, vector<16x128xf32> -> vector<16x128xf32>
    %c0_36 = arith.constant 0 : index
    %c0_37 = arith.constant 0 : index
    %c0_38 = arith.constant 0 : index
    %52 = vector.load %arg6[%c0_36, %c0_37, %c0_38] : memref<4x16x1xf32, #tpu.memory_space<vmem>>, vector<1x16x1xf32>
    %53 = vector.shape_cast %52 : vector<1x16x1xf32> to vector<16x1xf32>
    %54 = vector.broadcast %53 : vector<16x1xf32> to vector<16x128xf32>
    %55 = arith.addf %51, %54 : vector<16x128xf32>
    %56 = arith.addf %47, %55 : vector<16x128xf32>
    %cst_39 = arith.constant 0.000000e+00 : f32
    %57 = vector.broadcast %cst_39 : f32 to vector<16x128xf32>
    %58 = arith.maximumf %56, %57 : vector<16x128xf32>
    %c2_i32 = arith.constant 2 : i32
    %59 = tpu.dynamic_rotate %58 by %c2_i32 dim 1 : vector<16x128xf32>, i32 -> vector<16x128xf32>
    %c2 = arith.constant 2 : index
    %c0_40 = arith.constant 0 : index
    %c0_41 = arith.constant 0 : index
    %60 = vector.load %arg8[%c2, %c0_40, %c0_41] : memref<8x16x128xf32, #tpu.memory_space<vmem>>, vector<1x16x128xf32>
    %61 = vector.shape_cast %60 : vector<1x16x128xf32> to vector<16x128xf32>
    %c2_i32_42 = arith.constant 2 : i32
    %62 = vector.broadcast %c2_i32_42 : i32 to vector<16x128xi32>
    %63 = arith.cmpi slt, %5, %62 : vector<16x128xi32>
    %64 = arith.select %63, %61, %59 : vector<16x128xi1>, vector<16x128xf32>
    %65 = vector.extract_strided_slice %58 {offsets = [0, 126], sizes = [16, 2], strides = [1, 1]} : vector<16x128xf32> to vector<16x2xf32>
    %c2_43 = arith.constant 2 : index
    %c0_44 = arith.constant 0 : index
    %c0_45 = arith.constant 0 : index
    %66 = vector.load %arg8[%c2_43, %c0_44, %c0_45] : memref<8x16x128xf32, #tpu.memory_space<vmem>>, vector<1x16x2xf32>
    %67 = vector.shape_cast %66 : vector<1x16x2xf32> to vector<16x2xf32>
    %68 = vector.shape_cast %65 : vector<16x2xf32> to vector<1x16x2xf32>
    tpu.vector_store %arg8[%c2_43, %c0_44, %c0_45], %68 {strides = array<i32>} : memref<8x16x128xf32, #tpu.memory_space<vmem>>, vector<1x16x2xf32>,
    %69 = tpu.concatenate %64, %58 in 0 : vector<16x128xf32>, vector<16x128xf32> -> vector<32x128xf32>
    %c2_46 = arith.constant 2 : index
    %c0_47 = arith.constant 0 : index
    %c0_48 = arith.constant 0 : index
    %70 = vector.load %arg3[%c2_46, %c0_47, %c0_48] : memref<8x16x32xbf16, #tpu.memory_space<vmem>>, vector<1x16x32xbf16>
    %71 = vector.shape_cast %70 : vector<1x16x32xbf16> to vector<16x32xbf16>
    %72 = arith.truncf %69 : vector<32x128xf32> to vector<32x128xbf16>
    %cst_49 = arith.constant dense<0.000000e+00> : vector<16x128xf32>
    %73 = tpu.matmul %71, %72, %cst_49 {dimension_numbers = #tpu.dot_dimension_numbers<[1], [0], [0], [1], [0, 0, 1, 1], [], []>} : vector<16x32xbf16>, vector<32x128xbf16>, vector<16x128xf32> -> vector<16x128xf32>
    %c2_50 = arith.constant 2 : index
    %c0_51 = arith.constant 0 : index
    %c0_52 = arith.constant 0 : index
    %74 = vector.load %arg4[%c2_50, %c0_51, %c0_52] : memref<8x16x1xf32, #tpu.memory_space<vmem>>, vector<1x16x1xf32>
    %75 = vector.shape_cast %74 : vector<1x16x1xf32> to vector<16x1xf32>
    %76 = vector.broadcast %75 : vector<16x1xf32> to vector<16x128xf32>
    %77 = arith.addf %73, %76 : vector<16x128xf32>
    %cst_53 = arith.constant 0.000000e+00 : f32
    %78 = vector.broadcast %cst_53 : f32 to vector<16x128xf32>
    %79 = arith.maximumf %77, %78 : vector<16x128xf32>
    %c2_i32_54 = arith.constant 2 : i32
    %80 = tpu.dynamic_rotate %79 by %c2_i32_54 dim 1 : vector<16x128xf32>, i32 -> vector<16x128xf32>
    %c3 = arith.constant 3 : index
    %c0_55 = arith.constant 0 : index
    %c0_56 = arith.constant 0 : index
    %81 = vector.load %arg8[%c3, %c0_55, %c0_56] : memref<8x16x128xf32, #tpu.memory_space<vmem>>, vector<1x16x128xf32>
    %82 = vector.shape_cast %81 : vector<1x16x128xf32> to vector<16x128xf32>
    %c2_i32_57 = arith.constant 2 : i32
    %83 = vector.broadcast %c2_i32_57 : i32 to vector<16x128xi32>
    %84 = arith.cmpi slt, %5, %83 : vector<16x128xi32>
    %85 = arith.select %84, %82, %80 : vector<16x128xi1>, vector<16x128xf32>
    %86 = vector.extract_strided_slice %79 {offsets = [0, 126], sizes = [16, 2], strides = [1, 1]} : vector<16x128xf32> to vector<16x2xf32>
    %c3_58 = arith.constant 3 : index
    %c0_59 = arith.constant 0 : index
    %c0_60 = arith.constant 0 : index
    %87 = vector.load %arg8[%c3_58, %c0_59, %c0_60] : memref<8x16x128xf32, #tpu.memory_space<vmem>>, vector<1x16x2xf32>
    %88 = vector.shape_cast %87 : vector<1x16x2xf32> to vector<16x2xf32>
    %89 = vector.shape_cast %86 : vector<16x2xf32> to vector<1x16x2xf32>
    tpu.vector_store %arg8[%c3_58, %c0_59, %c0_60], %89 {strides = array<i32>} : memref<8x16x128xf32, #tpu.memory_space<vmem>>, vector<1x16x2xf32>,
    %90 = tpu.concatenate %85, %79 in 0 : vector<16x128xf32>, vector<16x128xf32> -> vector<32x128xf32>
    %c3_61 = arith.constant 3 : index
    %c0_62 = arith.constant 0 : index
    %c0_63 = arith.constant 0 : index
    %91 = vector.load %arg3[%c3_61, %c0_62, %c0_63] : memref<8x16x32xbf16, #tpu.memory_space<vmem>>, vector<1x16x32xbf16>
    %92 = vector.shape_cast %91 : vector<1x16x32xbf16> to vector<16x32xbf16>
    %93 = arith.truncf %90 : vector<32x128xf32> to vector<32x128xbf16>
    %cst_64 = arith.constant dense<0.000000e+00> : vector<16x128xf32>
    %94 = tpu.matmul %92, %93, %cst_64 {dimension_numbers = #tpu.dot_dimension_numbers<[1], [0], [0], [1], [0, 0, 1, 1], [], []>} : vector<16x32xbf16>, vector<32x128xbf16>, vector<16x128xf32> -> vector<16x128xf32>
    %c3_65 = arith.constant 3 : index
    %c0_66 = arith.constant 0 : index
    %c0_67 = arith.constant 0 : index
    %95 = vector.load %arg4[%c3_65, %c0_66, %c0_67] : memref<8x16x1xf32, #tpu.memory_space<vmem>>, vector<1x16x1xf32>
    %96 = vector.shape_cast %95 : vector<1x16x1xf32> to vector<16x1xf32>
    %97 = vector.broadcast %96 : vector<16x1xf32> to vector<16x128xf32>
    %98 = arith.addf %94, %97 : vector<16x128xf32>
    %cst_68 = arith.constant 0.000000e+00 : f32
    %99 = vector.broadcast %cst_68 : f32 to vector<16x128xf32>
    %100 = arith.maximumf %98, %99 : vector<16x128xf32>
    %c1_69 = arith.constant 1 : index
    %c0_70 = arith.constant 0 : index
    %c0_71 = arith.constant 0 : index
    %101 = vector.load %arg5[%c1_69, %c0_70, %c0_71] : memref<4x16x16xbf16, #tpu.memory_space<vmem>>, vector<1x16x16xbf16>
    %102 = vector.shape_cast %101 : vector<1x16x16xbf16> to vector<16x16xbf16>
    %103 = arith.truncf %58 : vector<16x128xf32> to vector<16x128xbf16>
    %cst_72 = arith.constant dense<0.000000e+00> : vector<16x128xf32>
    %104 = tpu.matmul %102, %103, %cst_72 {dimension_numbers = #tpu.dot_dimension_numbers<[1], [0], [0], [1], [0, 0, 1, 1], [], []>} : vector<16x16xbf16>, vector<16x128xbf16>, vector<16x128xf32> -> vector<16x128xf32>
    %c1_73 = arith.constant 1 : index
    %c0_74 = arith.constant 0 : index
    %c0_75 = arith.constant 0 : index
    %105 = vector.load %arg6[%c1_73, %c0_74, %c0_75] : memref<4x16x1xf32, #tpu.memory_space<vmem>>, vector<1x16x1xf32>
    %106 = vector.shape_cast %105 : vector<1x16x1xf32> to vector<16x1xf32>
    %107 = vector.broadcast %106 : vector<16x1xf32> to vector<16x128xf32>
    %108 = arith.addf %104, %107 : vector<16x128xf32>
    %109 = arith.addf %100, %108 : vector<16x128xf32>
    %cst_76 = arith.constant 0.000000e+00 : f32
    %110 = vector.broadcast %cst_76 : f32 to vector<16x128xf32>
    %111 = arith.maximumf %109, %110 : vector<16x128xf32>
    %c1_i32_77 = arith.constant 1 : i32
    %112 = tpu.dynamic_rotate %111 by %c1_i32_77 dim 1 : vector<16x128xf32>, i32 -> vector<16x128xf32>
    %c4 = arith.constant 4 : index
    %c0_78 = arith.constant 0 : index
    %c0_79 = arith.constant 0 : index
    %113 = vector.load %arg8[%c4, %c0_78, %c0_79] : memref<8x16x128xf32, #tpu.memory_space<vmem>>, vector<1x16x128xf32>
    %114 = vector.shape_cast %113 : vector<1x16x128xf32> to vector<16x128xf32>
    %c1_i32_80 = arith.constant 1 : i32
    %115 = vector.broadcast %c1_i32_80 : i32 to vector<16x128xi32>
    %116 = arith.cmpi slt, %5, %115 : vector<16x128xi32>
    %117 = arith.select %116, %114, %112 : vector<16x128xi1>, vector<16x128xf32>
    %118 = vector.extract_strided_slice %111 {offsets = [0, 127], sizes = [16, 1], strides = [1, 1]} : vector<16x128xf32> to vector<16x1xf32>
    %c4_81 = arith.constant 4 : index
    %c0_82 = arith.constant 0 : index
    %c0_83 = arith.constant 0 : index
    %119 = vector.load %arg8[%c4_81, %c0_82, %c0_83] : memref<8x16x128xf32, #tpu.memory_space<vmem>>, vector<1x16x1xf32>
    %120 = vector.shape_cast %119 : vector<1x16x1xf32> to vector<16x1xf32>
    %121 = vector.shape_cast %118 : vector<16x1xf32> to vector<1x16x1xf32>
    tpu.vector_store %arg8[%c4_81, %c0_82, %c0_83], %121 {strides = array<i32>} : memref<8x16x128xf32, #tpu.memory_space<vmem>>, vector<1x16x1xf32>,
    %122 = tpu.concatenate %117, %111 in 0 : vector<16x128xf32>, vector<16x128xf32> -> vector<32x128xf32>
    %c4_84 = arith.constant 4 : index
    %c0_85 = arith.constant 0 : index
    %c0_86 = arith.constant 0 : index
    %123 = vector.load %arg3[%c4_84, %c0_85, %c0_86] : memref<8x16x32xbf16, #tpu.memory_space<vmem>>, vector<1x16x32xbf16>
    %124 = vector.shape_cast %123 : vector<1x16x32xbf16> to vector<16x32xbf16>
    %125 = arith.truncf %122 : vector<32x128xf32> to vector<32x128xbf16>
    %cst_87 = arith.constant dense<0.000000e+00> : vector<16x128xf32>
    %126 = tpu.matmul %124, %125, %cst_87 {dimension_numbers = #tpu.dot_dimension_numbers<[1], [0], [0], [1], [0, 0, 1, 1], [], []>} : vector<16x32xbf16>, vector<32x128xbf16>, vector<16x128xf32> -> vector<16x128xf32>
    %c4_88 = arith.constant 4 : index
    %c0_89 = arith.constant 0 : index
    %c0_90 = arith.constant 0 : index
    %127 = vector.load %arg4[%c4_88, %c0_89, %c0_90] : memref<8x16x1xf32, #tpu.memory_space<vmem>>, vector<1x16x1xf32>
    %128 = vector.shape_cast %127 : vector<1x16x1xf32> to vector<16x1xf32>
    %129 = vector.broadcast %128 : vector<16x1xf32> to vector<16x128xf32>
    %130 = arith.addf %126, %129 : vector<16x128xf32>
    %cst_91 = arith.constant 0.000000e+00 : f32
    %131 = vector.broadcast %cst_91 : f32 to vector<16x128xf32>
    %132 = arith.maximumf %130, %131 : vector<16x128xf32>
    %c1_i32_92 = arith.constant 1 : i32
    %133 = tpu.dynamic_rotate %132 by %c1_i32_92 dim 1 : vector<16x128xf32>, i32 -> vector<16x128xf32>
    %c5 = arith.constant 5 : index
    %c0_93 = arith.constant 0 : index
    %c0_94 = arith.constant 0 : index
    %134 = vector.load %arg8[%c5, %c0_93, %c0_94] : memref<8x16x128xf32, #tpu.memory_space<vmem>>, vector<1x16x128xf32>
    %135 = vector.shape_cast %134 : vector<1x16x128xf32> to vector<16x128xf32>
    %c1_i32_95 = arith.constant 1 : i32
    %136 = vector.broadcast %c1_i32_95 : i32 to vector<16x128xi32>
    %137 = arith.cmpi slt, %5, %136 : vector<16x128xi32>
    %138 = arith.select %137, %135, %133 : vector<16x128xi1>, vector<16x128xf32>
    %139 = vector.extract_strided_slice %132 {offsets = [0, 127], sizes = [16, 1], strides = [1, 1]} : vector<16x128xf32> to vector<16x1xf32>
    %c5_96 = arith.constant 5 : index
    %c0_97 = arith.constant 0 : index
    %c0_98 = arith.constant 0 : index
    %140 = vector.load %arg8[%c5_96, %c0_97, %c0_98] : memref<8x16x128xf32, #tpu.memory_space<vmem>>, vector<1x16x1xf32>
    %141 = vector.shape_cast %140 : vector<1x16x1xf32> to vector<16x1xf32>
    %142 = vector.shape_cast %139 : vector<16x1xf32> to vector<1x16x1xf32>
    tpu.vector_store %arg8[%c5_96, %c0_97, %c0_98], %142 {strides = array<i32>} : memref<8x16x128xf32, #tpu.memory_space<vmem>>, vector<1x16x1xf32>,
    %143 = tpu.concatenate %138, %132 in 0 : vector<16x128xf32>, vector<16x128xf32> -> vector<32x128xf32>
    %c5_99 = arith.constant 5 : index
    %c0_100 = arith.constant 0 : index
    %c0_101 = arith.constant 0 : index
    %144 = vector.load %arg3[%c5_99, %c0_100, %c0_101] : memref<8x16x32xbf16, #tpu.memory_space<vmem>>, vector<1x16x32xbf16>
    %145 = vector.shape_cast %144 : vector<1x16x32xbf16> to vector<16x32xbf16>
    %146 = arith.truncf %143 : vector<32x128xf32> to vector<32x128xbf16>
    %cst_102 = arith.constant dense<0.000000e+00> : vector<16x128xf32>
    %147 = tpu.matmul %145, %146, %cst_102 {dimension_numbers = #tpu.dot_dimension_numbers<[1], [0], [0], [1], [0, 0, 1, 1], [], []>} : vector<16x32xbf16>, vector<32x128xbf16>, vector<16x128xf32> -> vector<16x128xf32>
    %c5_103 = arith.constant 5 : index
    %c0_104 = arith.constant 0 : index
    %c0_105 = arith.constant 0 : index
    %148 = vector.load %arg4[%c5_103, %c0_104, %c0_105] : memref<8x16x1xf32, #tpu.memory_space<vmem>>, vector<1x16x1xf32>
    %149 = vector.shape_cast %148 : vector<1x16x1xf32> to vector<16x1xf32>
    %150 = vector.broadcast %149 : vector<16x1xf32> to vector<16x128xf32>
    %151 = arith.addf %147, %150 : vector<16x128xf32>
    %cst_106 = arith.constant 0.000000e+00 : f32
    %152 = vector.broadcast %cst_106 : f32 to vector<16x128xf32>
    %153 = arith.maximumf %151, %152 : vector<16x128xf32>
    %c2_107 = arith.constant 2 : index
    %c0_108 = arith.constant 0 : index
    %c0_109 = arith.constant 0 : index
    %154 = vector.load %arg5[%c2_107, %c0_108, %c0_109] : memref<4x16x16xbf16, #tpu.memory_space<vmem>>, vector<1x16x16xbf16>
    %155 = vector.shape_cast %154 : vector<1x16x16xbf16> to vector<16x16xbf16>
    %156 = arith.truncf %111 : vector<16x128xf32> to vector<16x128xbf16>
    %cst_110 = arith.constant dense<0.000000e+00> : vector<16x128xf32>
    %157 = tpu.matmul %155, %156, %cst_110 {dimension_numbers = #tpu.dot_dimension_numbers<[1], [0], [0], [1], [0, 0, 1, 1], [], []>} : vector<16x16xbf16>, vector<16x128xbf16>, vector<16x128xf32> -> vector<16x128xf32>
    %c2_111 = arith.constant 2 : index
    %c0_112 = arith.constant 0 : index
    %c0_113 = arith.constant 0 : index
    %158 = vector.load %arg6[%c2_111, %c0_112, %c0_113] : memref<4x16x1xf32, #tpu.memory_space<vmem>>, vector<1x16x1xf32>
    %159 = vector.shape_cast %158 : vector<1x16x1xf32> to vector<16x1xf32>
    %160 = vector.broadcast %159 : vector<16x1xf32> to vector<16x128xf32>
    %161 = arith.addf %157, %160 : vector<16x128xf32>
    %162 = arith.addf %153, %161 : vector<16x128xf32>
    %cst_114 = arith.constant 0.000000e+00 : f32
    %163 = vector.broadcast %cst_114 : f32 to vector<16x128xf32>
    %164 = arith.maximumf %162, %163 : vector<16x128xf32>
    %c2_i32_115 = arith.constant 2 : i32
    %165 = tpu.dynamic_rotate %164 by %c2_i32_115 dim 1 : vector<16x128xf32>, i32 -> vector<16x128xf32>
    %c6 = arith.constant 6 : index
    %c0_116 = arith.constant 0 : index
    %c0_117 = arith.constant 0 : index
    %166 = vector.load %arg8[%c6, %c0_116, %c0_117] : memref<8x16x128xf32, #tpu.memory_space<vmem>>, vector<1x16x128xf32>
    %167 = vector.shape_cast %166 : vector<1x16x128xf32> to vector<16x128xf32>
    %c2_i32_118 = arith.constant 2 : i32
    %168 = vector.broadcast %c2_i32_118 : i32 to vector<16x128xi32>
    %169 = arith.cmpi slt, %5, %168 : vector<16x128xi32>
    %170 = arith.select %169, %167, %165 : vector<16x128xi1>, vector<16x128xf32>
    %171 = vector.extract_strided_slice %164 {offsets = [0, 126], sizes = [16, 2], strides = [1, 1]} : vector<16x128xf32> to vector<16x2xf32>
    %c6_119 = arith.constant 6 : index
    %c0_120 = arith.constant 0 : index
    %c0_121 = arith.constant 0 : index
    %172 = vector.load %arg8[%c6_119, %c0_120, %c0_121] : memref<8x16x128xf32, #tpu.memory_space<vmem>>, vector<1x16x2xf32>
    %173 = vector.shape_cast %172 : vector<1x16x2xf32> to vector<16x2xf32>
    %174 = vector.shape_cast %171 : vector<16x2xf32> to vector<1x16x2xf32>
    tpu.vector_store %arg8[%c6_119, %c0_120, %c0_121], %174 {strides = array<i32>} : memref<8x16x128xf32, #tpu.memory_space<vmem>>, vector<1x16x2xf32>,
    %175 = tpu.concatenate %170, %164 in 0 : vector<16x128xf32>, vector<16x128xf32> -> vector<32x128xf32>
    %c6_122 = arith.constant 6 : index
    %c0_123 = arith.constant 0 : index
    %c0_124 = arith.constant 0 : index
    %176 = vector.load %arg3[%c6_122, %c0_123, %c0_124] : memref<8x16x32xbf16, #tpu.memory_space<vmem>>, vector<1x16x32xbf16>
    %177 = vector.shape_cast %176 : vector<1x16x32xbf16> to vector<16x32xbf16>
    %178 = arith.truncf %175 : vector<32x128xf32> to vector<32x128xbf16>
    %cst_125 = arith.constant dense<0.000000e+00> : vector<16x128xf32>
    %179 = tpu.matmul %177, %178, %cst_125 {dimension_numbers = #tpu.dot_dimension_numbers<[1], [0], [0], [1], [0, 0, 1, 1], [], []>} : vector<16x32xbf16>, vector<32x128xbf16>, vector<16x128xf32> -> vector<16x128xf32>
    %c6_126 = arith.constant 6 : index
    %c0_127 = arith.constant 0 : index
    %c0_128 = arith.constant 0 : index
    %180 = vector.load %arg4[%c6_126, %c0_127, %c0_128] : memref<8x16x1xf32, #tpu.memory_space<vmem>>, vector<1x16x1xf32>
    %181 = vector.shape_cast %180 : vector<1x16x1xf32> to vector<16x1xf32>
    %182 = vector.broadcast %181 : vector<16x1xf32> to vector<16x128xf32>
    %183 = arith.addf %179, %182 : vector<16x128xf32>
    %cst_129 = arith.constant 0.000000e+00 : f32
    %184 = vector.broadcast %cst_129 : f32 to vector<16x128xf32>
    %185 = arith.maximumf %183, %184 : vector<16x128xf32>
    %c2_i32_130 = arith.constant 2 : i32
    %186 = tpu.dynamic_rotate %185 by %c2_i32_130 dim 1 : vector<16x128xf32>, i32 -> vector<16x128xf32>
    %c7 = arith.constant 7 : index
    %c0_131 = arith.constant 0 : index
    %c0_132 = arith.constant 0 : index
    %187 = vector.load %arg8[%c7, %c0_131, %c0_132] : memref<8x16x128xf32, #tpu.memory_space<vmem>>, vector<1x16x128xf32>
    %188 = vector.shape_cast %187 : vector<1x16x128xf32> to vector<16x128xf32>
    %c2_i32_133 = arith.constant 2 : i32
    %189 = vector.broadcast %c2_i32_133 : i32 to vector<16x128xi32>
    %190 = arith.cmpi slt, %5, %189 : vector<16x128xi32>
    %191 = arith.select %190, %188, %186 : vector<16x128xi1>, vector<16x128xf32>
    %192 = vector.extract_strided_slice %185 {offsets = [0, 126], sizes = [16, 2], strides = [1, 1]} : vector<16x128xf32> to vector<16x2xf32>
    %c7_134 = arith.constant 7 : index
    %c0_135 = arith.constant 0 : index
    %c0_136 = arith.constant 0 : index
    %193 = vector.load %arg8[%c7_134, %c0_135, %c0_136] : memref<8x16x128xf32, #tpu.memory_space<vmem>>, vector<1x16x2xf32>
    %194 = vector.shape_cast %193 : vector<1x16x2xf32> to vector<16x2xf32>
    %195 = vector.shape_cast %192 : vector<16x2xf32> to vector<1x16x2xf32>
    tpu.vector_store %arg8[%c7_134, %c0_135, %c0_136], %195 {strides = array<i32>} : memref<8x16x128xf32, #tpu.memory_space<vmem>>, vector<1x16x2xf32>,
    %196 = tpu.concatenate %191, %185 in 0 : vector<16x128xf32>, vector<16x128xf32> -> vector<32x128xf32>
    %c7_137 = arith.constant 7 : index
    %c0_138 = arith.constant 0 : index
    %c0_139 = arith.constant 0 : index
    %197 = vector.load %arg3[%c7_137, %c0_138, %c0_139] : memref<8x16x32xbf16, #tpu.memory_space<vmem>>, vector<1x16x32xbf16>
    %198 = vector.shape_cast %197 : vector<1x16x32xbf16> to vector<16x32xbf16>
    %199 = arith.truncf %196 : vector<32x128xf32> to vector<32x128xbf16>
    %cst_140 = arith.constant dense<0.000000e+00> : vector<16x128xf32>
    %200 = tpu.matmul %198, %199, %cst_140 {dimension_numbers = #tpu.dot_dimension_numbers<[1], [0], [0], [1], [0, 0, 1, 1], [], []>} : vector<16x32xbf16>, vector<32x128xbf16>, vector<16x128xf32> -> vector<16x128xf32>
    %c7_141 = arith.constant 7 : index
    %c0_142 = arith.constant 0 : index
    %c0_143 = arith.constant 0 : index
    %201 = vector.load %arg4[%c7_141, %c0_142, %c0_143] : memref<8x16x1xf32, #tpu.memory_space<vmem>>, vector<1x16x1xf32>
    %202 = vector.shape_cast %201 : vector<1x16x1xf32> to vector<16x1xf32>
    %203 = vector.broadcast %202 : vector<16x1xf32> to vector<16x128xf32>
    %204 = arith.addf %200, %203 : vector<16x128xf32>
    %cst_144 = arith.constant 0.000000e+00 : f32
    %205 = vector.broadcast %cst_144 : f32 to vector<16x128xf32>
    %206 = arith.maximumf %204, %205 : vector<16x128xf32>
    %c3_145 = arith.constant 3 : index
    %c0_146 = arith.constant 0 : index
    %c0_147 = arith.constant 0 : index
    %207 = vector.load %arg5[%c3_145, %c0_146, %c0_147] : memref<4x16x16xbf16, #tpu.memory_space<vmem>>, vector<1x16x16xbf16>
    %208 = vector.shape_cast %207 : vector<1x16x16xbf16> to vector<16x16xbf16>
    %209 = arith.truncf %164 : vector<16x128xf32> to vector<16x128xbf16>
    %cst_148 = arith.constant dense<0.000000e+00> : vector<16x128xf32>
    %210 = tpu.matmul %208, %209, %cst_148 {dimension_numbers = #tpu.dot_dimension_numbers<[1], [0], [0], [1], [0, 0, 1, 1], [], []>} : vector<16x16xbf16>, vector<16x128xbf16>, vector<16x128xf32> -> vector<16x128xf32>
    %c3_149 = arith.constant 3 : index
    %c0_150 = arith.constant 0 : index
    %c0_151 = arith.constant 0 : index
    %211 = vector.load %arg6[%c3_149, %c0_150, %c0_151] : memref<4x16x1xf32, #tpu.memory_space<vmem>>, vector<1x16x1xf32>
    %212 = vector.shape_cast %211 : vector<1x16x1xf32> to vector<16x1xf32>
    %213 = vector.broadcast %212 : vector<16x1xf32> to vector<16x128xf32>
    %214 = arith.addf %210, %213 : vector<16x128xf32>
    %215 = arith.addf %206, %214 : vector<16x128xf32>
    %cst_152 = arith.constant 0.000000e+00 : f32
    %216 = vector.broadcast %cst_152 : f32 to vector<16x128xf32>
    %217 = arith.maximumf %215, %216 : vector<16x128xf32>
    %218 = vector.extract_strided_slice %217 {offsets = [0, 0], sizes = [4, 128], strides = [1, 1]} : vector<16x128xf32> to vector<4x128xf32>
    %c0_153 = arith.constant 0 : index
    %c0_154 = arith.constant 0 : index
    %c0_155 = arith.constant 0 : index
    %219 = vector.load %arg7[%c0_153, %c0_154, %c0_155] : memref<1x4x128xf32, #tpu.memory_space<vmem>>, vector<1x4x128xf32>
    %220 = vector.shape_cast %219 : vector<1x4x128xf32> to vector<4x128xf32>
    %221 = vector.shape_cast %218 : vector<4x128xf32> to vector<1x4x128xf32>
    tpu.vector_store %arg7[%c0_153, %c0_154, %c0_155], %221 {strides = array<i32>} : memref<1x4x128xf32, #tpu.memory_space<vmem>>, vector<1x4x128xf32>,
    return
  }
  func.func @transform_0(%arg0: i32, %arg1: i32) -> (i32, i32, i32) {
    %c0_i32 = arith.constant 0 : i32
    %c0_i32_0 = arith.constant 0 : i32
    return %arg0, %c0_i32, %arg1 : i32, i32, i32
  }
  func.func @transform_1(%arg0: i32, %arg1: i32) -> (i32, i32, i32) {
    %c0_i32 = arith.constant 0 : i32
    %c0_i32_0 = arith.constant 0 : i32
    %c0_i32_1 = arith.constant 0 : i32
    %c0_i32_2 = arith.constant 0 : i32
    return %c0_i32, %c0_i32_0, %c0_i32_1 : i32, i32, i32
  }
  func.func @transform_2(%arg0: i32, %arg1: i32) -> (i32, i32, i32) {
    %c0_i32 = arith.constant 0 : i32
    %c0_i32_0 = arith.constant 0 : i32
    %c0_i32_1 = arith.constant 0 : i32
    %c0_i32_2 = arith.constant 0 : i32
    return %c0_i32, %c0_i32_0, %c0_i32_1 : i32, i32, i32
  }
  func.func @transform_3(%arg0: i32, %arg1: i32) -> (i32, i32, i32) {
    %c0_i32 = arith.constant 0 : i32
    %c0_i32_0 = arith.constant 0 : i32
    %c0_i32_1 = arith.constant 0 : i32
    %c0_i32_2 = arith.constant 0 : i32
    return %c0_i32, %c0_i32_0, %c0_i32_1 : i32, i32, i32
  }
  func.func @transform_4(%arg0: i32, %arg1: i32) -> (i32, i32, i32) {
    %c0_i32 = arith.constant 0 : i32
    %c0_i32_0 = arith.constant 0 : i32
    %c0_i32_1 = arith.constant 0 : i32
    %c0_i32_2 = arith.constant 0 : i32
    return %c0_i32, %c0_i32_0, %c0_i32_1 : i32, i32, i32
  }
  func.func @transform_5(%arg0: i32, %arg1: i32) -> (i32, i32, i32) {
    %c0_i32 = arith.constant 0 : i32
    %c0_i32_0 = arith.constant 0 : i32
    return %arg0, %c0_i32, %arg1 : i32, i32, i32
  }
}

</mosaic_0001>

<llo_original>
// kernel: tpu_custom_call.1
$region0: #{tpu_custom_call.1}
  #allocation0 [shape = 'u32[]', space=smem, size = 0x4, offset = 0x4, fixed_abs, tag = 'smem constant byte address 0x4 - core index']
  #allocation1 [shape = 'u32[144,128]{1,0:T(1,128)}', space=vmem, size = 0x12000, scoped, tag = 'internal scratch']
  #allocation2 [shape = 'f32[8,16,128]{2,1,0:T(8,128)}', space=vmem, size = 0x10000, scoped, tag = 'scratch operand']
  %s0 = inlined_call_operand.vmem [shape: f32[2,16,256], index: 0, kind: input, shape index: {}]
  %s1 = inlined_call_operand.vmem [shape: bf16[8,16,32], index: 1, kind: input, shape index: {}]
  %s2 = inlined_call_operand.vmem [shape: f32[8,16,1], index: 2, kind: input, shape index: {}]
  %s3 = inlined_call_operand.vmem [shape: bf16[4,16,16], index: 3, kind: input, shape index: {}]
  %s4 = inlined_call_operand.vmem [shape: f32[4,16,1], index: 4, kind: input, shape index: {}]
  %s5 = inlined_call_operand.hbm [shape: f32[2,4,256], index: 5, kind: output, shape index: {}]
  %s6 = sld [smem:[#allocation0]]
  $region95: #{tpu_custom_call.1} parent=0
    _
  %s8 = ssub.s32 1, %s6
  %s9 = scalar_select 0, %s8, %s6
  $region1: #{tpu_custom_call.1} parent=0
    #allocation3 [shape = 'u8[16384]{0}', space=vmem, size = 0x4000, scoped, tag = 'input window, operand 0']
    #allocation4 [shape = 'u8[4096]{0}', space=vmem, size = 0x1000, scoped, tag = 'output window, operand 0']
    #allocation5 [shape = 's32[2]{0}', space=sflag, size = 0x8, scoped, tag = 'scoped memory for tpu_custom_call.1']
    %10 = vsyncpa [#allocation5], 0
    %s11 = scalar_lea.sflag [#allocation5], 1
    %12 = vsyncpa %s11, 0
    loop: start=0, step=1, limit=6
    $region2: #{tpu_custom_call.1} parent=1 // loop_pre_header
      _
    $region3: #{tpu_custom_call.1} parent=1 // loop_header
      %s14 = sphi 0, %s18
      %p15 = scmp.ge.s32.totalorder %s14, 6
      %s21 = sphi 0, %s33
      %s22 = sphi 0, %s29
      %s23 = sphi 0, %s21
      %s24 = sphi 0, %s22
      %s25 = sphi 0, %s23
      %s26 = sphi 0, %s24
      %s38 = sphi 0, %s40
      %s41 = sphi 0, %s38
      %s42 = sphi 0, %s41
      %s58 = sphi 0, %s42
      %s62 = sphi 0, %s62
      %s64 = sphi 0, %s62
      %s65 = sphi 0, %s64
      %s79 = sphi 0, %s65
      %s83 = sphi 0, %s83
      %s85 = sphi 0, %s83
      %s86 = sphi 0, %s85
      %s100 = sphi 0, %s86
      %s104 = sphi 0, %s104
      %s106 = sphi 0, %s104
      %s107 = sphi 0, %s106
      %s121 = sphi 0, %s107
      %s125 = sphi 0, %s125
      %s127 = sphi 0, %s125
      %s128 = sphi 0, %s127
      %s142 = sphi 0, %s128
      %s150 = sphi 0, %s152
      %s153 = sphi 0, %s150
      %s154 = sphi 0, %s153
      %s170 = sphi 0, %s154
    $region4: #{tpu_custom_call.1} parent=1 // loop_header_branch
      %17 = sbr.rel (%p15) target = $region8
    $region5: #{tpu_custom_call.1} parent=1 // loop_body
      %s19 = ssub.s32 %s14, 1
      %s20 = ssub.s32 %s14, 2
      %s27 = sadd.s32 1, %s22
      %p28 = scmp.ge.s32.totalorder %s27, 2
      %s29 = scalar_select %p28, 0, %s27
      %s30 = sadd.s32 1, %s21
      %s31 = scalar_select %p28, %s30, %s21
      %p32 = scmp.ge.s32.totalorder %s31, 2
      %s33 = scalar_select %p32, 0, %s31
      %s34 = ssub.s32 %s21, %s33
      %s35 = ssub.s32 %s22, %s29
      %s36 = sor.u32 %s34, %s35
      %p37 = scmp.eq.s32.totalorder %s36, 0
      %s39 = sadd.s32 %s38, 1
      %s40 = scalar_select %p37, %s38, %s39
      %p43 = pneg %p37
      %p44 = scmp.eq.s32.totalorder %s14, 3
      %p45 = por %p43, %p44
      %p46 = scmp.ne.s32.totalorder %s38, %s41
      %p47 = scmp.eq.s32.totalorder %s14, 0
      %p48 = por %p46, %p47
      %p49 = scmp.ne.s32.totalorder %s38, %s41
      %p50 = scmp.eq.s32.totalorder %s19, 3
      %p51 = por %p49, %p50
      %p52 = scmp.ne.s32.totalorder %s41, %s42
      %p53 = scmp.eq.s32.totalorder %s19, 0
      %p54 = por %p52, %p53
      %p55 = scmp.ne.s32.totalorder %s41, %s42
      %p56 = scmp.eq.s32.totalorder %s20, 3
      %p57 = por %p55, %p56
      %p59 = scmp.ne.s32.totalorder %s42, %s58
      %p60 = scmp.eq.s32.totalorder %s20, 0
      %p61 = por %p59, %p60
      %s63 = sadd.s32 %s62, 1
      %p66 = scmp.eq.s32.totalorder %s14, 3
      %p67 = scmp.ne.s32.totalorder %s62, %s64
      %p68 = scmp.eq.s32.totalorder %s14, 0
      %p69 = por %p67, %p68
      %p70 = scmp.ne.s32.totalorder %s62, %s64
      %p71 = scmp.eq.s32.totalorder %s19, 3
      %p72 = por %p70, %p71
      %p73 = scmp.ne.s32.totalorder %s64, %s65
      %p74 = scmp.eq.s32.totalorder %s19, 0
      %p75 = por %p73, %p74
      %p76 = scmp.ne.s32.totalorder %s64, %s65
      %p77 = scmp.eq.s32.totalorder %s20, 3
      %p78 = por %p76, %p77
      %p80 = scmp.ne.s32.totalorder %s65, %s79
      %p81 = scmp.eq.s32.totalorder %s20, 0
      %p82 = por %p80, %p81
      %s84 = sadd.s32 %s83, 1
      %p87 = scmp.eq.s32.totalorder %s14, 3
      %p88 = scmp.ne.s32.totalorder %s83, %s85
      %p89 = scmp.eq.s32.totalorder %s14, 0
      %p90 = por %p88, %p89
      %p91 = scmp.ne.s32.totalorder %s83, %s85
      %p92 = scmp.eq.s32.totalorder %s19, 3
      %p93 = por %p91, %p92
      %p94 = scmp.ne.s32.totalorder %s85, %s86
      %p95 = scmp.eq.s32.totalorder %s19, 0
      %p96 = por %p94, %p95
      %p97 = scmp.ne.s32.totalorder %s85, %s86
      %p98 = scmp.eq.s32.totalorder %s20, 3
      %p99 = por %p97, %p98
      %p101 = scmp.ne.s32.totalorder %s86, %s100
      %p102 = scmp.eq.s32.totalorder %s20, 0
      %p103 = por %p101, %p102
      %s105 = sadd.s32 %s104, 1
      %p108 = scmp.eq.s32.totalorder %s14, 3
      %p109 = scmp.ne.s32.totalorder %s104, %s106
      %p110 = scmp.eq.s32.totalorder %s14, 0
      %p111 = por %p109, %p110
      %p112 = scmp.ne.s32.totalorder %s104, %s106
      %p113 = scmp.eq.s32.totalorder %s19, 3
      %p114 = por %p112, %p113
      %p115 = scmp.ne.s32.totalorder %s106, %s107
      %p116 = scmp.eq.s32.totalorder %s19, 0
      %p117 = por %p115, %p116
      %p118 = scmp.ne.s32.totalorder %s106, %s107
      %p119 = scmp.eq.s32.totalorder %s20, 3
      %p120 = por %p118, %p119
      %p122 = scmp.ne.s32.totalorder %s107, %s121
      %p123 = scmp.eq.s32.totalorder %s20, 0
      %p124 = por %p122, %p123
      %s126 = sadd.s32 %s125, 1
      %p129 = scmp.eq.s32.totalorder %s14, 3
      %p130 = scmp.ne.s32.totalorder %s125, %s127
      %p131 = scmp.eq.s32.totalorder %s14, 0
      %p132 = por %p130, %p131
      %p133 = scmp.ne.s32.totalorder %s125, %s127
      %p134 = scmp.eq.s32.totalorder %s19, 3
      %p135 = por %p133, %p134
      %p136 = scmp.ne.s32.totalorder %s127, %s128
      %p137 = scmp.eq.s32.totalorder %s19, 0
      %p138 = por %p136, %p137
      %p139 = scmp.ne.s32.totalorder %s127, %s128
      %p140 = scmp.eq.s32.totalorder %s20, 3
      %p141 = por %p139, %p140
      %p143 = scmp.ne.s32.totalorder %s128, %s142
      %p144 = scmp.eq.s32.totalorder %s20, 0
      %p145 = por %p143, %p144
      %s146 = ssub.s32 %s21, %s33
      %s147 = ssub.s32 %s22, %s29
      %s148 = sor.u32 %s146, %s147
      %p149 = scmp.eq.s32.totalorder %s148, 0
      %s151 = sadd.s32 %s150, 1
      %s152 = scalar_select %p149, %s150, %s151
      %p155 = pneg %p149
      %p156 = scmp.eq.s32.totalorder %s14, 3
      %p157 = por %p155, %p156
      %p158 = scmp.ne.s32.totalorder %s150, %s153
      %p159 = scmp.eq.s32.totalorder %s14, 0
      %p160 = por %p158, %p159
      %p161 = scmp.ne.s32.totalorder %s150, %s153
      %p162 = scmp.eq.s32.totalorder %s19, 3
      %p163 = por %p161, %p162
      %p164 = scmp.ne.s32.totalorder %s153, %s154
      %p165 = scmp.eq.s32.totalorder %s19, 0
      %p166 = por %p164, %p165
      %p167 = scmp.ne.s32.totalorder %s153, %s154
      %p168 = scmp.eq.s32.totalorder %s20, 3
      %p169 = por %p167, %p168
      %p171 = scmp.ne.s32.totalorder %s154, %s170
      %p172 = scmp.eq.s32.totalorder %s20, 0
      %p173 = por %p171, %p172
      %p174 = scmp.le.s32.totalorder 1, %s14
      %p175 = scmp.lt.s32.totalorder %s14, 5
      %p176 = pnand %p174, %p175
      %p177 = pneg %p176
      // Predicated region
      $region9: #{tpu_custom_call.1} parent=5 // pred_check
        _
      $region10: #{tpu_custom_call.1} parent=5 // pred_check_branch
        %179 = sbr.rel (%p176) target = $region12
      $region11: #{tpu_custom_call.1} parent=5 // pred_region
        %s180 = ssub.s32 %s14, 1
        // Predicated region
        $region13: #{tpu_custom_call.1} parent=11 // pred_check
          %p181 = pneg %p75
        $region14: #{tpu_custom_call.1} parent=11 // pred_check_branch
          %183 = sbr.rel (%p181) target = $region16
        $region15: #{tpu_custom_call.1} parent=11 // pred_region
          _
        $region16: #{tpu_custom_call.1} parent=11 // pred_fallthru
          _
        // Predicated region
        $region17: #{tpu_custom_call.1} parent=11 // pred_check
          %p184 = pneg %p96
        $region18: #{tpu_custom_call.1} parent=11 // pred_check_branch
          %186 = sbr.rel (%p184) target = $region20
        $region19: #{tpu_custom_call.1} parent=11 // pred_region
          _
        $region20: #{tpu_custom_call.1} parent=11 // pred_fallthru
          _
        // Predicated region
        $region21: #{tpu_custom_call.1} parent=11 // pred_check
          %p187 = pneg %p117
        $region22: #{tpu_custom_call.1} parent=11 // pred_check_branch
          %189 = sbr.rel (%p187) target = $region24
        $region23: #{tpu_custom_call.1} parent=11 // pred_region
          _
        $region24: #{tpu_custom_call.1} parent=11 // pred_fallthru
          _
        // Predicated region
        $region25: #{tpu_custom_call.1} parent=11 // pred_check
          %p190 = pneg %p138
        $region26: #{tpu_custom_call.1} parent=11 // pred_check_branch
          %192 = sbr.rel (%p190) target = $region28
        $region27: #{tpu_custom_call.1} parent=11 // pred_region
          _
        $region28: #{tpu_custom_call.1} parent=11 // pred_fallthru
          _
      $region12: #{tpu_custom_call.1} parent=5 // pred_fallthru
        _
      %p193 = scmp.lt.s32.totalorder %s14, 4
      // Predicated region
      $region29: #{tpu_custom_call.1} parent=5 // pred_check
        %p194 = pneg %p193
      $region30: #{tpu_custom_call.1} parent=5 // pred_check_branch
        %196 = sbr.rel (%p194) target = $region32
      $region31: #{tpu_custom_call.1} parent=5 // pred_region
        // Predicated region
        $region33: #{tpu_custom_call.1} parent=31 // pred_check
          %p197 = pneg %p48
        $region34: #{tpu_custom_call.1} parent=31 // pred_check_branch
          %199 = sbr.rel (%p197) target = $region36
        $region35: #{tpu_custom_call.1} parent=31 // pred_region
          %s200 = sand.u32 %s38, 1
          %s201 = sand.u32 %s38, 1
          %s202 = smul.addr %s201, 16
          %s203 = scalar_lea.vmem [#allocation3], %s202
          %s204 = smul.addr %s21, 4
          %s205 = sadd.s32 %s22, %s204
          %s206 = smul.addr %s205, 8
          %s207 = scalar_lea.vmem %s0, %s206
          // Predicated region
          $region37: #{tpu_custom_call.1} parent=35 // pred_check
            _
          $region38: #{tpu_custom_call.1} parent=35 // pred_check_branch
            %209 = sbr.rel (0) target = $region40
          $region39: #{tpu_custom_call.1} parent=35 // pred_region
            // Predicated region
            $region41: #{tpu_custom_call.1} parent=39 // pred_check
              _
            $region42: #{tpu_custom_call.1} parent=39 // pred_check_branch
              %211 = sbr.rel (0) target = $region44
            $region43: #{tpu_custom_call.1} parent=39 // pred_region
              // Predicated region
              $region56: #{tpu_custom_call.1} parent=43 // pred_check
                _
              $region57: #{tpu_custom_call.1} parent=43 // pred_check_branch
                %228 = sbr.rel (0) target = $region59
              $region58: #{tpu_custom_call.1} parent=43 // pred_region
                loop: start=0, step=1, limit=1
                $region60: #{tpu_custom_call.1} parent=58 // loop_pre_header
                  _
                $region61: #{tpu_custom_call.1} parent=58 // loop_header
                  %s230 = sphi 0, %s234
                  %p231 = scmp.ge.s32.totalorder %s230, 1
                  %s235 = sphi %s207, %s207
                  %s236 = sphi %s203, %s203
                $region62: #{tpu_custom_call.1} parent=58 // loop_header_branch
                  %233 = sbr.rel (%p231) target = $region66
                $region63: #{tpu_custom_call.1} parent=58 // loop_body
                  %v237 = vld [vmem:[%s235] sm:$0xff]
                  %238 = vst [vmem:[%s236] sm:$0xff] %v237
                  %v239 = vld [vmem:[%s235 + $0x10] sm:$0xff]
                  %240 = vst [vmem:[%s236 + $0x8] sm:$0xff] %v239
                $region64: #{tpu_custom_call.1} parent=58 // loop_footer
                  %s234 = sadd.s32 1, %s230
                $region65: #{tpu_custom_call.1} parent=58 // loop_footer_branch
                  %229 = sbr.rel target = $region61
                $region66: #{tpu_custom_call.1} parent=58 // loop_exit
                  _
              $region59: #{tpu_custom_call.1} parent=43 // pred_fallthru
                _
              // Predicated region
              $region67: #{tpu_custom_call.1} parent=43 // pred_check
                _
              $region68: #{tpu_custom_call.1} parent=43 // pred_check_branch
                %242 = sbr.rel target = $region70
              $region69: #{tpu_custom_call.1} parent=43 // pred_region
                _
              $region70: #{tpu_custom_call.1} parent=43 // pred_fallthru
                _
            $region44: #{tpu_custom_call.1} parent=39 // pred_fallthru
              _
            // Predicated region
            $region45: #{tpu_custom_call.1} parent=39 // pred_check
              _
            $region46: #{tpu_custom_call.1} parent=39 // pred_check_branch
              %213 = sbr.rel target = $region48
            $region47: #{tpu_custom_call.1} parent=39 // pred_region
              loop: start=0, step=1, limit=1
              $region49: #{tpu_custom_call.1} parent=47 // loop_pre_header
                _
              $region50: #{tpu_custom_call.1} parent=47 // loop_header
                %s216 = sphi 0, %s220
                %p217 = scmp.ge.s32.totalorder %s216, 1
                %s221 = sphi %s207, %s207
                %s222 = sphi %s203, %s203
              $region51: #{tpu_custom_call.1} parent=47 // loop_header_branch
                %219 = sbr.rel (%p217) target = $region55
              $region52: #{tpu_custom_call.1} parent=47 // loop_body
                %v223 = vld [vmem:[%s221] sm:$0xff]
                %224 = vst [vmem:[%s222] sm:$0xff] %v223
                %v225 = vld [vmem:[%s221 + $0x10] sm:$0xff]
                %226 = vst [vmem:[%s222 + $0x8] sm:$0xff] %v225
              $region53: #{tpu_custom_call.1} parent=47 // loop_footer
                %s220 = sadd.s32 1, %s216
              $region54: #{tpu_custom_call.1} parent=47 // loop_footer_branch
                %215 = sbr.rel target = $region50
              $region55: #{tpu_custom_call.1} parent=47 // loop_exit
                _
            $region48: #{tpu_custom_call.1} parent=39 // pred_fallthru
              _
          $region40: #{tpu_custom_call.1} parent=35 // pred_fallthru
            _
          %243 = vnop
        $region36: #{tpu_custom_call.1} parent=31 // pred_fallthru
          _
      $region32: #{tpu_custom_call.1} parent=5 // pred_fallthru
        _
      %p244 = scmp.le.s32.totalorder 1, %s14
      %p245 = scmp.lt.s32.totalorder %s14, 5
      %p246 = pnand %p244, %p245
      %p247 = pneg %p246
      // Predicated region
      $region71: #{tpu_custom_call.1} parent=5 // pred_check
        _
      $region72: #{tpu_custom_call.1} parent=5 // pred_check_branch
        %249 = sbr.rel (%p246) target = $region74
      $region73: #{tpu_custom_call.1} parent=5 // pred_region
        %s250 = ssub.s32 %s14, 1
        %s251 = sand.u32 %s41, 1
        %s252 = sand.u32 %s41, 1
        %s253 = smul.addr %s252, 16
        %s254 = scalar_lea.vmem [#allocation3], %s253
        // Predicated region
        $region75: #{tpu_custom_call.1} parent=73 // pred_check
          %p255 = pneg %p54
        $region76: #{tpu_custom_call.1} parent=73 // pred_check_branch
          %257 = sbr.rel (%p255) target = $region78
        $region77: #{tpu_custom_call.1} parent=73 // pred_region
          _
        $region78: #{tpu_custom_call.1} parent=73 // pred_fallthru
          _
        %s258 = sand.u32 %s41, 1
        %s259 = sand.u32 %s41, 1
        %s260 = smul.addr %s259, 16
        %s261 = scalar_lea.vmem [#allocation3], %s260
        %p262 = pneg %p54
        %p263 = pneg %p51
        %p264 = pneg %p75
        %p265 = pneg %p72
        %p266 = pneg %p96
        %p267 = pneg %p93
        %p268 = pneg %p117
        %p269 = pneg %p114
        %p270 = pneg %p138
        %p271 = pneg %p135
        %p272 = pneg %p166
        %p273 = pneg %p163
        %s274 = sand.u32 %s153, 1
        %s275 = scalar_lea.sflag [#allocation5], %s274
        %s276 = sand.u32 %s153, 1
        %s277 = smul.addr %s276, 4
        %s278 = scalar_lea.vmem [#allocation4], %s277
        %p280 = scmp.eq.s32.totalorder %s24, 0
        // Predicated region
        $region79: #{tpu_custom_call.1} parent=73 // pred_check
          %p281 = pneg %p280
        $region80: #{tpu_custom_call.1} parent=73 // pred_check_branch
          %283 = sbr.rel (%p281) target = $region82
        $region81: #{tpu_custom_call.1} parent=73 // pred_region
          %vm284 = vcmask 15360
          %285 = vst.msk [vmem:[#allocation2] sm:$0xff] %vm284, 0.0
          %286 = vst.msk [vmem:[#allocation2 + $0x8] sm:$0xff] %vm284, 0.0
          %287 = vst.msk [vmem:[#allocation2 + $0x10] sm:$0xff] %vm284, 0.0
          %288 = vst.msk [vmem:[#allocation2 + $0x18] sm:$0xff] %vm284, 0.0
          %289 = vst.msk [vmem:[#allocation2 + $0x20] sm:$0xff] %vm284, 0.0
          %290 = vst.msk [vmem:[#allocation2 + $0x28] sm:$0xff] %vm284, 0.0
          %291 = vst.msk [vmem:[#allocation2 + $0x30] sm:$0xff] %vm284, 0.0
          %292 = vst.msk [vmem:[#allocation2 + $0x38] sm:$0xff] %vm284, 0.0
          %293 = vst.msk [vmem:[#allocation2 + $0x40] sm:$0xff] %vm284, 0.0
          %294 = vst.msk [vmem:[#allocation2 + $0x48] sm:$0xff] %vm284, 0.0
          %295 = vst.msk [vmem:[#allocation2 + $0x50] sm:$0xff] %vm284, 0.0
          %296 = vst.msk [vmem:[#allocation2 + $0x58] sm:$0xff] %vm284, 0.0
          %297 = vst.msk [vmem:[#allocation2 + $0x60] sm:$0xff] %vm284, 0.0
          %298 = vst.msk [vmem:[#allocation2 + $0x68] sm:$0xff] %vm284, 0.0
          %299 = vst.msk [vmem:[#allocation2 + $0x70] sm:$0xff] %vm284, 0.0
          %300 = vst.msk [vmem:[#allocation2 + $0x78] sm:$0xff] %vm284, 0.0
        $region82: #{tpu_custom_call.1} parent=73 // pred_fallthru
          _
        %v301 = vld [vmem:[%s254] sm:$0xff]
        %v302 = vld [vmem:[%s254 + $0x8] sm:$0xff]
        %v303 = vlaneseq
        %v304 = vand.u32 %v303, 127
        %305 = vrot.lane.b32.xlu0 %v301, 1
        %v306 = vpop.permute.xlu0 %305
        %307 = vrot.lane.b32.xlu0 %v302, 1
        %v308 = vpop.permute.xlu0 %307
        %v309 = vld [vmem:[#allocation2] sm:$0xff]
        %v310 = vld [vmem:[#allocation2 + $0x8] sm:$0xff]
        %vm311 = vcmp.lt.s32.totalorder %v304, 1
        %v312 = vsel %vm311, %v309, %v306
        %v313 = vsel %vm311, %v310, %v308
        %316 = vrot.lane.b32.xlu0 %v301, 1
        %v317 = vpop.permute.xlu0 %316
        %318 = vrot.lane.b32.xlu0 %v302, 1
        %v319 = vpop.permute.xlu0 %318
        %vm322 = vcmask 7168
        %323 = vst.msk [vmem:[#allocation2] sm:$0xff] %vm322, %v317
        %324 = vst.msk [vmem:[#allocation2 + $0x8] sm:$0xff] %vm322, %v319
        %v325 = vld [vmem:[%s1] sm:$0xf]
        %v326 = vld [vmem:[%s1 + $0x4] sm:$0xf]
        %v327 = vpack.c.bf16 %v313, %v312
        %v328 = vpack.c.bf16 %v302, %v301
        %v329 = vld [vmem:[%s2] sm:$0xff]
        %v330 = vld [vmem:[%s2 + $0x8] sm:$0xff]
        %332 = vset.pattern.permute.xlu0 0
        %333 = vperm.xlu0 %332, %v329
        %v334 = vpop.permute.xlu0 %333
        %337 = vset.pattern.permute.xlu0 0
        %338 = vperm.xlu0 %337, %v330
        %v339 = vpop.permute.xlu0 %338
        %v343 = vunpack.c.l.b16 %v325
        %v344 = vunpack.c.l.b16 %v326
        %v345 = vpack.c.b16 %v344, %v343
        %vm346 = vcmask 261120
        %v348 = vsel %vm346, %v345, 0
        %350 = vmatprep.subr.bf16.mxu0 0
        %351 = vmatpush1.bf16.msra.mxu0 %v327
        %352 = vmatprep.subr.bf16.mxu0 0
        %353 = vmatpush1.bf16.msra.mxu0 %v328
        %354 = vmatprep.subr.bf16.mxu0 0
        %355 = vmatpush1.bf16.msra.mxu0 0
        %356 = vmatprep.subr.bf16.mxu0 0
        %357 = vmatpush1.bf16.msra.mxu0 0
        %358 = vmatprep.subr.bf16.mxu0 0
        %359 = vmatpush1.bf16.msra.mxu0 0
        %360 = vmatprep.subr.bf16.mxu0 0
        %361 = vmatpush1.bf16.msra.mxu0 0
        %362 = vmatprep.subr.bf16.mxu0 0
        %363 = vmatpush1.bf16.msra.mxu0 0
        %364 = vmatprep.subr.bf16.mxu0 0
        %365 = vmatpush1.bf16.msra.mxu0 0
        %366 = vmatprep.subr.bf16.mxu0 0
        %367 = vmatpush1.bf16.msra.mxu0 0
        %368 = vmatprep.subr.bf16.mxu0 0
        %369 = vmatpush1.bf16.msra.mxu0 0
        %370 = vmatprep.subr.bf16.mxu0 0
        %371 = vmatpush1.bf16.msra.mxu0 0
        %372 = vmatprep.subr.bf16.mxu0 0
        %373 = vmatpush1.bf16.msra.mxu0 0
        %374 = vmatprep.subr.bf16.mxu0 0
        %375 = vmatpush1.bf16.msra.mxu0 0
        %376 = vmatprep.subr.bf16.mxu0 0
        %377 = vmatpush1.bf16.msra.mxu0 0
        %378 = vmatprep.subr.bf16.mxu0 0
        %379 = vmatpush1.bf16.msra.mxu0 0
        %380 = vmatprep.subr.bf16.mxu0 0
        %381 = vmatpush1.bf16.msra.mxu0 0
        %382 = vmatprep.mubr.bf16.mxu0 0
        %383 = vmatmul.mubr.bf16.gmra.mrb[0].mxu0 %v348
        %v384 = vpop.f32.mrb[0].mxu0
        %v385 = vadd.f32 %v334, %v384
        %v386 = vpop.f32.mrb[0].mxu0
        %v387 = vpop.f32.mrb[0].mxu0
        %v388 = vadd.f32 %v339, %v387
        %v389 = vpop.f32.mrb[0].mxu0
        %390 = vdwg.mxu0
        %v391 = vmax.f32 %v385, 0.0
        %v392 = vmax.f32 %v388, 0.0
        %393 = vrot.lane.b32.xlu0 %v391, 1
        %v394 = vpop.permute.xlu0 %393
        %395 = vrot.lane.b32.xlu0 %v392, 1
        %v396 = vpop.permute.xlu0 %395
        %s397 = scalar_lea.vmem [#allocation2], 16
        %v398 = vld [vmem:[%s397] sm:$0xff]
        %v399 = vld [vmem:[%s397 + $0x8] sm:$0xff]
        %v400 = vsel %vm311, %v398, %v394
        %v401 = vsel %vm311, %v399, %v396
        %404 = vrot.lane.b32.xlu0 %v391, 1
        %v405 = vpop.permute.xlu0 %404
        %406 = vrot.lane.b32.xlu0 %v392, 1
        %v407 = vpop.permute.xlu0 %406
        %410 = vst.msk [vmem:[%s397] sm:$0xff] %vm322, %v405
        %411 = vst.msk [vmem:[%s397 + $0x8] sm:$0xff] %vm322, %v407
        %s412 = scalar_lea.vmem %s1, 8
        %v413 = vld [vmem:[%s412] sm:$0xf]
        %v414 = vld [vmem:[%s412 + $0x4] sm:$0xf]
        %v415 = vpack.c.bf16 %v401, %v400
        %v416 = vpack.c.bf16 %v392, %v391
        %s417 = scalar_lea.vmem %s2, 16
        %v418 = vld [vmem:[%s417] sm:$0xff]
        %v419 = vld [vmem:[%s417 + $0x8] sm:$0xff]
        %421 = vset.pattern.permute.xlu0 0
        %422 = vperm.xlu0 %421, %v418
        %v423 = vpop.permute.xlu0 %422
        %426 = vset.pattern.permute.xlu0 0
        %427 = vperm.xlu0 %426, %v419
        %v428 = vpop.permute.xlu0 %427
        %v432 = vunpack.c.l.b16 %v413
        %v433 = vunpack.c.l.b16 %v414
        %v434 = vpack.c.b16 %v433, %v432
        %v436 = vsel %vm346, %v434, 0
        %438 = vmatprep.subr.bf16.mxu0 0
        %439 = vmatpush1.bf16.msra.mxu0 %v415
        %440 = vmatprep.subr.bf16.mxu0 0
        %441 = vmatpush1.bf16.msra.mxu0 %v416
        %442 = vmatprep.subr.bf16.mxu0 0
        %443 = vmatpush1.bf16.msra.mxu0 0
        %444 = vmatprep.subr.bf16.mxu0 0
        %445 = vmatpush1.bf16.msra.mxu0 0
        %446 = vmatprep.subr.bf16.mxu0 0
        %447 = vmatpush1.bf16.msra.mxu0 0
        %448 = vmatprep.subr.bf16.mxu0 0
        %449 = vmatpush1.bf16.msra.mxu0 0
        %450 = vmatprep.subr.bf16.mxu0 0
        %451 = vmatpush1.bf16.msra.mxu0 0
        %452 = vmatprep.subr.bf16.mxu0 0
        %453 = vmatpush1.bf16.msra.mxu0 0
        %454 = vmatprep.subr.bf16.mxu0 0
        %455 = vmatpush1.bf16.msra.mxu0 0
        %456 = vmatprep.subr.bf16.mxu0 0
        %457 = vmatpush1.bf16.msra.mxu0 0
        %458 = vmatprep.subr.bf16.mxu0 0
        %459 = vmatpush1.bf16.msra.mxu0 0
        %460 = vmatprep.subr.bf16.mxu0 0
        %461 = vmatpush1.bf16.msra.mxu0 0
        %462 = vmatprep.subr.bf16.mxu0 0
        %463 = vmatpush1.bf16.msra.mxu0 0
        %464 = vmatprep.subr.bf16.mxu0 0
        %465 = vmatpush1.bf16.msra.mxu0 0
        %466 = vmatprep.subr.bf16.mxu0 0
        %467 = vmatpush1.bf16.msra.mxu0 0
        %468 = vmatprep.subr.bf16.mxu0 0
        %469 = vmatpush1.bf16.msra.mxu0 0
        %470 = vmatprep.mubr.bf16.mxu0 0
        %471 = vmatmul.mubr.bf16.gmra.mrb[0].mxu0 %v436
        %v472 = vpop.f32.mrb[0].mxu0
        %v473 = vadd.f32 %v423, %v472
        %v474 = vpop.f32.mrb[0].mxu0
        %v475 = vpop.f32.mrb[0].mxu0
        %v476 = vadd.f32 %v428, %v475
        %v477 = vpop.f32.mrb[0].mxu0
        %478 = vdwg.mxu0
        %v479 = vmax.f32 %v473, 0.0
        %v480 = vmax.f32 %v476, 0.0
        %v481 = vld [vmem:[%s3] sm:$0xf]
        %v482 = vld [vmem:[%s3 + $0x4] sm:$0xf]
        %v483 = vld [vmem:[%s4] sm:$0xff]
        %v484 = vld [vmem:[%s4 + $0x8] sm:$0xff]
        %486 = vset.pattern.permute.xlu0 0
        %487 = vperm.xlu0 %486, %v483
        %v488 = vpop.permute.xlu0 %487
        %491 = vset.pattern.permute.xlu0 0
        %492 = vperm.xlu0 %491, %v484
        %v493 = vpop.permute.xlu0 %492
        %v497 = vunpack.c.l.b16 %v481
        %v498 = vunpack.c.l.b16 %v482
        %v499 = vpack.c.b16 %v498, %v497
        %vm500 = vcmask 130048
        %v502 = vsel %vm500, %v499, 0
        %504 = vmatprep.subr.bf16.mxu0 0
        %505 = vmatpush1.bf16.msra.mxu0 %v328
        %506 = vmatprep.subr.bf16.mxu0 0
        %507 = vmatpush1.bf16.msra.mxu0 0
        %508 = vmatprep.subr.bf16.mxu0 0
        %509 = vmatpush1.bf16.msra.mxu0 0
        %510 = vmatprep.subr.bf16.mxu0 0
        %511 = vmatpush1.bf16.msra.mxu0 0
        %512 = vmatprep.subr.bf16.mxu0 0
        %513 = vmatpush1.bf16.msra.mxu0 0
        %514 = vmatprep.subr.bf16.mxu0 0
        %515 = vmatpush1.bf16.msra.mxu0 0
        %516 = vmatprep.subr.bf16.mxu0 0
        %517 = vmatpush1.bf16.msra.mxu0 0
        %518 = vmatprep.subr.bf16.mxu0 0
        %519 = vmatpush1.bf16.msra.mxu0 0
        %520 = vmatprep.subr.bf16.mxu0 0
        %521 = vmatpush1.bf16.msra.mxu0 0
        %522 = vmatprep.subr.bf16.mxu0 0
        %523 = vmatpush1.bf16.msra.mxu0 0
        %524 = vmatprep.subr.bf16.mxu0 0
        %525 = vmatpush1.bf16.msra.mxu0 0
        %526 = vmatprep.subr.bf16.mxu0 0
        %527 = vmatpush1.bf16.msra.mxu0 0
        %528 = vmatprep.subr.bf16.mxu0 0
        %529 = vmatpush1.bf16.msra.mxu0 0
        %530 = vmatprep.subr.bf16.mxu0 0
        %531 = vmatpush1.bf16.msra.mxu0 0
        %532 = vmatprep.subr.bf16.mxu0 0
        %533 = vmatpush1.bf16.msra.mxu0 0
        %534 = vmatprep.subr.bf16.mxu0 0
        %535 = vmatpush1.bf16.msra.mxu0 0
        %536 = vmatprep.mubr.bf16.mxu0 0
        %537 = vmatmul.mubr.bf16.gmra.mrb[0].mxu0 %v502
        %v538 = vpop.f32.mrb[0].mxu0
        %v539 = vadd.f32 %v488, %v538
        %v540 = vpop.f32.mrb[0].mxu0
        %v541 = vpop.f32.mrb[0].mxu0
        %v542 = vadd.f32 %v493, %v541
        %v543 = vpop.f32.mrb[0].mxu0
        %544 = vdwg.mxu0
        %v545 = vadd.f32 %v479, %v539
        %v546 = vadd.f32 %v480, %v542
        %v547 = vmax.f32 %v545, 0.0
        %v548 = vmax.f32 %v546, 0.0
        %549 = vrot.lane.b32.xlu0 %v547, 2
        %v550 = vpop.permute.xlu0 %549
        %551 = vrot.lane.b32.xlu0 %v548, 2
        %v552 = vpop.permute.xlu0 %551
        %s553 = scalar_lea.vmem [#allocation2], 32
        %v554 = vld [vmem:[%s553] sm:$0xff]
        %v555 = vld [vmem:[%s553 + $0x8] sm:$0xff]
        %vm556 = vcmp.lt.s32.totalorder %v304, 2
        %v557 = vsel %vm556, %v554, %v550
        %v558 = vsel %vm556, %v555, %v552
        %561 = vrot.lane.b32.xlu0 %v547, 2
        %v562 = vpop.permute.xlu0 %561
        %563 = vrot.lane.b32.xlu0 %v548, 2
        %v564 = vpop.permute.xlu0 %563
        %vm567 = vcmask 15360
        %568 = vst.msk [vmem:[%s553] sm:$0xff] %vm567, %v562
        %569 = vst.msk [vmem:[%s553 + $0x8] sm:$0xff] %vm567, %v564
        %s570 = scalar_lea.vmem %s1, 16
        %v571 = vld [vmem:[%s570] sm:$0xf]
        %v572 = vld [vmem:[%s570 + $0x4] sm:$0xf]
        %v573 = vpack.c.bf16 %v558, %v557
        %v574 = vpack.c.bf16 %v548, %v547
        %s575 = scalar_lea.vmem %s2, 32
        %v576 = vld [vmem:[%s575] sm:$0xff]
        %v577 = vld [vmem:[%s575 + $0x8] sm:$0xff]
        %579 = vset.pattern.permute.xlu0 0
        %580 = vperm.xlu0 %579, %v576
        %v581 = vpop.permute.xlu0 %580
        %584 = vset.pattern.permute.xlu0 0
        %585 = vperm.xlu0 %584, %v577
        %v586 = vpop.permute.xlu0 %585
        %v590 = vunpack.c.l.b16 %v571
        %v591 = vunpack.c.l.b16 %v572
        %v592 = vpack.c.b16 %v591, %v590
        %v594 = vsel %vm346, %v592, 0
        %596 = vmatprep.subr.bf16.mxu0 0
        %597 = vmatpush1.bf16.msra.mxu0 %v573
        %598 = vmatprep.subr.bf16.mxu0 0
        %599 = vmatpush1.bf16.msra.mxu0 %v574
        %600 = vmatprep.subr.bf16.mxu0 0
        %601 = vmatpush1.bf16.msra.mxu0 0
        %602 = vmatprep.subr.bf16.mxu0 0
        %603 = vmatpush1.bf16.msra.mxu0 0
        %604 = vmatprep.subr.bf16.mxu0 0
        %605 = vmatpush1.bf16.msra.mxu0 0
        %606 = vmatprep.subr.bf16.mxu0 0
        %607 = vmatpush1.bf16.msra.mxu0 0
        %608 = vmatprep.subr.bf16.mxu0 0
        %609 = vmatpush1.bf16.msra.mxu0 0
        %610 = vmatprep.subr.bf16.mxu0 0
        %611 = vmatpush1.bf16.msra.mxu0 0
        %612 = vmatprep.subr.bf16.mxu0 0
        %613 = vmatpush1.bf16.msra.mxu0 0
        %614 = vmatprep.subr.bf16.mxu0 0
        %615 = vmatpush1.bf16.msra.mxu0 0
        %616 = vmatprep.subr.bf16.mxu0 0
        %617 = vmatpush1.bf16.msra.mxu0 0
        %618 = vmatprep.subr.bf16.mxu0 0
        %619 = vmatpush1.bf16.msra.mxu0 0
        %620 = vmatprep.subr.bf16.mxu0 0
        %621 = vmatpush1.bf16.msra.mxu0 0
        %622 = vmatprep.subr.bf16.mxu0 0
        %623 = vmatpush1.bf16.msra.mxu0 0
        %624 = vmatprep.subr.bf16.mxu0 0
        %625 = vmatpush1.bf16.msra.mxu0 0
        %626 = vmatprep.subr.bf16.mxu0 0
        %627 = vmatpush1.bf16.msra.mxu0 0
        %628 = vmatprep.mubr.bf16.mxu0 0
        %629 = vmatmul.mubr.bf16.gmra.mrb[0].mxu0 %v594
        %v630 = vpop.f32.mrb[0].mxu0
        %v631 = vadd.f32 %v581, %v630
        %v632 = vpop.f32.mrb[0].mxu0
        %v633 = vpop.f32.mrb[0].mxu0
        %v634 = vadd.f32 %v586, %v633
        %v635 = vpop.f32.mrb[0].mxu0
        %636 = vdwg.mxu0
        %v637 = vmax.f32 %v631, 0.0
        %v638 = vmax.f32 %v634, 0.0
        %639 = vrot.lane.b32.xlu0 %v637, 2
        %v640 = vpop.permute.xlu0 %639
        %641 = vrot.lane.b32.xlu0 %v638, 2
        %v642 = vpop.permute.xlu0 %641
        %s643 = scalar_lea.vmem [#allocation2], 48
        %v644 = vld [vmem:[%s643] sm:$0xff]
        %v645 = vld [vmem:[%s643 + $0x8] sm:$0xff]
        %v646 = vsel %vm556, %v644, %v640
        %v647 = vsel %vm556, %v645, %v642
        %650 = vrot.lane.b32.xlu0 %v637, 2
        %v651 = vpop.permute.xlu0 %650
        %652 = vrot.lane.b32.xlu0 %v638, 2
        %v653 = vpop.permute.xlu0 %652
        %656 = vst.msk [vmem:[%s643] sm:$0xff] %vm567, %v651
        %657 = vst.msk [vmem:[%s643 + $0x8] sm:$0xff] %vm567, %v653
        %s658 = scalar_lea.vmem %s1, 24
        %v659 = vld [vmem:[%s658] sm:$0xf]
        %v660 = vld [vmem:[%s658 + $0x4] sm:$0xf]
        %v661 = vpack.c.bf16 %v647, %v646
        %v662 = vpack.c.bf16 %v638, %v637
        %s663 = scalar_lea.vmem %s2, 48
        %v664 = vld [vmem:[%s663] sm:$0xff]
        %v665 = vld [vmem:[%s663 + $0x8] sm:$0xff]
        %667 = vset.pattern.permute.xlu0 0
        %668 = vperm.xlu0 %667, %v664
        %v669 = vpop.permute.xlu0 %668
        %672 = vset.pattern.permute.xlu0 0
        %673 = vperm.xlu0 %672, %v665
        %v674 = vpop.permute.xlu0 %673
        %v678 = vunpack.c.l.b16 %v659
        %v679 = vunpack.c.l.b16 %v660
        %v680 = vpack.c.b16 %v679, %v678
        %v682 = vsel %vm346, %v680, 0
        %684 = vmatprep.subr.bf16.mxu0 0
        %685 = vmatpush1.bf16.msra.mxu0 %v661
        %686 = vmatprep.subr.bf16.mxu0 0
        %687 = vmatpush1.bf16.msra.mxu0 %v662
        %688 = vmatprep.subr.bf16.mxu0 0
        %689 = vmatpush1.bf16.msra.mxu0 0
        %690 = vmatprep.subr.bf16.mxu0 0
        %691 = vmatpush1.bf16.msra.mxu0 0
        %692 = vmatprep.subr.bf16.mxu0 0
        %693 = vmatpush1.bf16.msra.mxu0 0
        %694 = vmatprep.subr.bf16.mxu0 0
        %695 = vmatpush1.bf16.msra.mxu0 0
        %696 = vmatprep.subr.bf16.mxu0 0
        %697 = vmatpush1.bf16.msra.mxu0 0
        %698 = vmatprep.subr.bf16.mxu0 0
        %699 = vmatpush1.bf16.msra.mxu0 0
        %700 = vmatprep.subr.bf16.mxu0 0
        %701 = vmatpush1.bf16.msra.mxu0 0
        %702 = vmatprep.subr.bf16.mxu0 0
        %703 = vmatpush1.bf16.msra.mxu0 0
        %704 = vmatprep.subr.bf16.mxu0 0
        %705 = vmatpush1.bf16.msra.mxu0 0
        %706 = vmatprep.subr.bf16.mxu0 0
        %707 = vmatpush1.bf16.msra.mxu0 0
        %708 = vmatprep.subr.bf16.mxu0 0
        %709 = vmatpush1.bf16.msra.mxu0 0
        %710 = vmatprep.subr.bf16.mxu0 0
        %711 = vmatpush1.bf16.msra.mxu0 0
        %712 = vmatprep.subr.bf16.mxu0 0
        %713 = vmatpush1.bf16.msra.mxu0 0
        %714 = vmatprep.subr.bf16.mxu0 0
        %715 = vmatpush1.bf16.msra.mxu0 0
        %716 = vmatprep.mubr.bf16.mxu0 0
        %717 = vmatmul.mubr.bf16.gmra.mrb[0].mxu0 %v682
        %v718 = vpop.f32.mrb[0].mxu0
        %v719 = vadd.f32 %v669, %v718
        %v720 = vpop.f32.mrb[0].mxu0
        %v721 = vpop.f32.mrb[0].mxu0
        %v722 = vadd.f32 %v674, %v721
        %v723 = vpop.f32.mrb[0].mxu0
        %724 = vdwg.mxu0
        %v725 = vmax.f32 %v719, 0.0
        %v726 = vmax.f32 %v722, 0.0
        %s727 = scalar_lea.vmem %s3, 8
        %v728 = vld [vmem:[%s727] sm:$0xf]
        %v729 = vld [vmem:[%s727 + $0x4] sm:$0xf]
        %s730 = scalar_lea.vmem %s4, 16
        %v731 = vld [vmem:[%s730] sm:$0xff]
        %v732 = vld [vmem:[%s730 + $0x8] sm:$0xff]
        %734 = vset.pattern.permute.xlu0 0
        %735 = vperm.xlu0 %734, %v731
        %v736 = vpop.permute.xlu0 %735
        %739 = vset.pattern.permute.xlu0 0
        %740 = vperm.xlu0 %739, %v732
        %v741 = vpop.permute.xlu0 %740
        %v745 = vunpack.c.l.b16 %v728
        %v746 = vunpack.c.l.b16 %v729
        %v747 = vpack.c.b16 %v746, %v745
        %v749 = vsel %vm500, %v747, 0
        %751 = vmatprep.subr.bf16.mxu0 0
        %752 = vmatpush1.bf16.msra.mxu0 %v574
        %753 = vmatprep.subr.bf16.mxu0 0
        %754 = vmatpush1.bf16.msra.mxu0 0
        %755 = vmatprep.subr.bf16.mxu0 0
        %756 = vmatpush1.bf16.msra.mxu0 0
        %757 = vmatprep.subr.bf16.mxu0 0
        %758 = vmatpush1.bf16.msra.mxu0 0
        %759 = vmatprep.subr.bf16.mxu0 0
        %760 = vmatpush1.bf16.msra.mxu0 0
        %761 = vmatprep.subr.bf16.mxu0 0
        %762 = vmatpush1.bf16.msra.mxu0 0
        %763 = vmatprep.subr.bf16.mxu0 0
        %764 = vmatpush1.bf16.msra.mxu0 0
        %765 = vmatprep.subr.bf16.mxu0 0
        %766 = vmatpush1.bf16.msra.mxu0 0
        %767 = vmatprep.subr.bf16.mxu0 0
        %768 = vmatpush1.bf16.msra.mxu0 0
        %769 = vmatprep.subr.bf16.mxu0 0
        %770 = vmatpush1.bf16.msra.mxu0 0
        %771 = vmatprep.subr.bf16.mxu0 0
        %772 = vmatpush1.bf16.msra.mxu0 0
        %773 = vmatprep.subr.bf16.mxu0 0
        %774 = vmatpush1.bf16.msra.mxu0 0
        %775 = vmatprep.subr.bf16.mxu0 0
        %776 = vmatpush1.bf16.msra.mxu0 0
        %777 = vmatprep.subr.bf16.mxu0 0
        %778 = vmatpush1.bf16.msra.mxu0 0
        %779 = vmatprep.subr.bf16.mxu0 0
        %780 = vmatpush1.bf16.msra.mxu0 0
        %781 = vmatprep.subr.bf16.mxu0 0
        %782 = vmatpush1.bf16.msra.mxu0 0
        %783 = vmatprep.mubr.bf16.mxu0 0
        %784 = vmatmul.mubr.bf16.gmra.mrb[0].mxu0 %v749
        %v785 = vpop.f32.mrb[0].mxu0
        %v786 = vadd.f32 %v736, %v785
        %v787 = vpop.f32.mrb[0].mxu0
        %v788 = vpop.f32.mrb[0].mxu0
        %v789 = vadd.f32 %v741, %v788
        %v790 = vpop.f32.mrb[0].mxu0
        %791 = vdwg.mxu0
        %v792 = vadd.f32 %v725, %v786
        %v793 = vadd.f32 %v726, %v789
        %v794 = vmax.f32 %v792, 0.0
        %v795 = vmax.f32 %v793, 0.0
        %796 = vrot.lane.b32.xlu0 %v794, 1
        %v797 = vpop.permute.xlu0 %796
        %798 = vrot.lane.b32.xlu0 %v795, 1
        %v799 = vpop.permute.xlu0 %798
        %s800 = scalar_lea.vmem [#allocation2], 64
        %v801 = vld [vmem:[%s800] sm:$0xff]
        %v802 = vld [vmem:[%s800 + $0x8] sm:$0xff]
        %v803 = vsel %vm311, %v801, %v797
        %v804 = vsel %vm311, %v802, %v799
        %807 = vrot.lane.b32.xlu0 %v794, 1
        %v808 = vpop.permute.xlu0 %807
        %809 = vrot.lane.b32.xlu0 %v795, 1
        %v810 = vpop.permute.xlu0 %809
        %813 = vst.msk [vmem:[%s800] sm:$0xff] %vm322, %v808
        %814 = vst.msk [vmem:[%s800 + $0x8] sm:$0xff] %vm322, %v810
        %s815 = scalar_lea.vmem %s1, 32
        %v816 = vld [vmem:[%s815] sm:$0xf]
        %v817 = vld [vmem:[%s815 + $0x4] sm:$0xf]
        %v818 = vpack.c.bf16 %v804, %v803
        %v819 = vpack.c.bf16 %v795, %v794
        %s820 = scalar_lea.vmem %s2, 64
        %v821 = vld [vmem:[%s820] sm:$0xff]
        %v822 = vld [vmem:[%s820 + $0x8] sm:$0xff]
        %824 = vset.pattern.permute.xlu0 0
        %825 = vperm.xlu0 %824, %v821
        %v826 = vpop.permute.xlu0 %825
        %829 = vset.pattern.permute.xlu0 0
        %830 = vperm.xlu0 %829, %v822
        %v831 = vpop.permute.xlu0 %830
        %v835 = vunpack.c.l.b16 %v816
        %v836 = vunpack.c.l.b16 %v817
        %v837 = vpack.c.b16 %v836, %v835
        %v839 = vsel %vm346, %v837, 0
        %841 = vmatprep.subr.bf16.mxu0 0
        %842 = vmatpush1.bf16.msra.mxu0 %v818
        %843 = vmatprep.subr.bf16.mxu0 0
        %844 = vmatpush1.bf16.msra.mxu0 %v819
        %845 = vmatprep.subr.bf16.mxu0 0
        %846 = vmatpush1.bf16.msra.mxu0 0
        %847 = vmatprep.subr.bf16.mxu0 0
        %848 = vmatpush1.bf16.msra.mxu0 0
        %849 = vmatprep.subr.bf16.mxu0 0
        %850 = vmatpush1.bf16.msra.mxu0 0
        %851 = vmatprep.subr.bf16.mxu0 0
        %852 = vmatpush1.bf16.msra.mxu0 0
        %853 = vmatprep.subr.bf16.mxu0 0
        %854 = vmatpush1.bf16.msra.mxu0 0
        %855 = vmatprep.subr.bf16.mxu0 0
        %856 = vmatpush1.bf16.msra.mxu0 0
        %857 = vmatprep.subr.bf16.mxu0 0
        %858 = vmatpush1.bf16.msra.mxu0 0
        %859 = vmatprep.subr.bf16.mxu0 0
        %860 = vmatpush1.bf16.msra.mxu0 0
        %861 = vmatprep.subr.bf16.mxu0 0
        %862 = vmatpush1.bf16.msra.mxu0 0
        %863 = vmatprep.subr.bf16.mxu0 0
        %864 = vmatpush1.bf16.msra.mxu0 0
        %865 = vmatprep.subr.bf16.mxu0 0
        %866 = vmatpush1.bf16.msra.mxu0 0
        %867 = vmatprep.subr.bf16.mxu0 0
        %868 = vmatpush1.bf16.msra.mxu0 0
        %869 = vmatprep.subr.bf16.mxu0 0
        %870 = vmatpush1.bf16.msra.mxu0 0
        %871 = vmatprep.subr.bf16.mxu0 0
        %872 = vmatpush1.bf16.msra.mxu0 0
        %873 = vmatprep.mubr.bf16.mxu0 0
        %874 = vmatmul.mubr.bf16.gmra.mrb[0].mxu0 %v839
        %v875 = vpop.f32.mrb[0].mxu0
        %v876 = vadd.f32 %v826, %v875
        %v877 = vpop.f32.mrb[0].mxu0
        %v878 = vpop.f32.mrb[0].mxu0
        %v879 = vadd.f32 %v831, %v878
        %v880 = vpop.f32.mrb[0].mxu0
        %881 = vdwg.mxu0
        %v882 = vmax.f32 %v876, 0.0
        %v883 = vmax.f32 %v879, 0.0
        %884 = vrot.lane.b32.xlu0 %v882, 1
        %v885 = vpop.permute.xlu0 %884
        %886 = vrot.lane.b32.xlu0 %v883, 1
        %v887 = vpop.permute.xlu0 %886
        %s888 = scalar_lea.vmem [#allocation2], 80
        %v889 = vld [vmem:[%s888] sm:$0xff]
        %v890 = vld [vmem:[%s888 + $0x8] sm:$0xff]
        %v891 = vsel %vm311, %v889, %v885
        %v892 = vsel %vm311, %v890, %v887
        %895 = vrot.lane.b32.xlu0 %v882, 1
        %v896 = vpop.permute.xlu0 %895
        %897 = vrot.lane.b32.xlu0 %v883, 1
        %v898 = vpop.permute.xlu0 %897
        %901 = vst.msk [vmem:[%s888] sm:$0xff] %vm322, %v896
        %902 = vst.msk [vmem:[%s888 + $0x8] sm:$0xff] %vm322, %v898
        %s903 = scalar_lea.vmem %s1, 40
        %v904 = vld [vmem:[%s903] sm:$0xf]
        %v905 = vld [vmem:[%s903 + $0x4] sm:$0xf]
        %v906 = vpack.c.bf16 %v892, %v891
        %v907 = vpack.c.bf16 %v883, %v882
        %s908 = scalar_lea.vmem %s2, 80
        %v909 = vld [vmem:[%s908] sm:$0xff]
        %v910 = vld [vmem:[%s908 + $0x8] sm:$0xff]
        %912 = vset.pattern.permute.xlu0 0
        %913 = vperm.xlu0 %912, %v909
        %v914 = vpop.permute.xlu0 %913
        %917 = vset.pattern.permute.xlu0 0
        %918 = vperm.xlu0 %917, %v910
        %v919 = vpop.permute.xlu0 %918
        %v923 = vunpack.c.l.b16 %v904
        %v924 = vunpack.c.l.b16 %v905
        %v925 = vpack.c.b16 %v924, %v923
        %v927 = vsel %vm346, %v925, 0
        %929 = vmatprep.subr.bf16.mxu0 0
        %930 = vmatpush1.bf16.msra.mxu0 %v906
        %931 = vmatprep.subr.bf16.mxu0 0
        %932 = vmatpush1.bf16.msra.mxu0 %v907
        %933 = vmatprep.subr.bf16.mxu0 0
        %934 = vmatpush1.bf16.msra.mxu0 0
        %935 = vmatprep.subr.bf16.mxu0 0
        %936 = vmatpush1.bf16.msra.mxu0 0
        %937 = vmatprep.subr.bf16.mxu0 0
        %938 = vmatpush1.bf16.msra.mxu0 0
        %939 = vmatprep.subr.bf16.mxu0 0
        %940 = vmatpush1.bf16.msra.mxu0 0
        %941 = vmatprep.subr.bf16.mxu0 0
        %942 = vmatpush1.bf16.msra.mxu0 0
        %943 = vmatprep.subr.bf16.mxu0 0
        %944 = vmatpush1.bf16.msra.mxu0 0
        %945 = vmatprep.subr.bf16.mxu0 0
        %946 = vmatpush1.bf16.msra.mxu0 0
        %947 = vmatprep.subr.bf16.mxu0 0
        %948 = vmatpush1.bf16.msra.mxu0 0
        %949 = vmatprep.subr.bf16.mxu0 0
        %950 = vmatpush1.bf16.msra.mxu0 0
        %951 = vmatprep.subr.bf16.mxu0 0
        %952 = vmatpush1.bf16.msra.mxu0 0
        %953 = vmatprep.subr.bf16.mxu0 0
        %954 = vmatpush1.bf16.msra.mxu0 0
        %955 = vmatprep.subr.bf16.mxu0 0
        %956 = vmatpush1.bf16.msra.mxu0 0
        %957 = vmatprep.subr.bf16.mxu0 0
        %958 = vmatpush1.bf16.msra.mxu0 0
        %959 = vmatprep.subr.bf16.mxu0 0
        %960 = vmatpush1.bf16.msra.mxu0 0
        %961 = vmatprep.mubr.bf16.mxu0 0
        %962 = vmatmul.mubr.bf16.gmra.mrb[0].mxu0 %v927
        %v963 = vpop.f32.mrb[0].mxu0
        %v964 = vadd.f32 %v914, %v963
        %v965 = vpop.f32.mrb[0].mxu0
        %v966 = vpop.f32.mrb[0].mxu0
        %v967 = vadd.f32 %v919, %v966
        %v968 = vpop.f32.mrb[0].mxu0
        %969 = vdwg.mxu0
        %v970 = vmax.f32 %v964, 0.0
        %v971 = vmax.f32 %v967, 0.0
        %s972 = scalar_lea.vmem %s3, 16
        %v973 = vld [vmem:[%s972] sm:$0xf]
        %v974 = vld [vmem:[%s972 + $0x4] sm:$0xf]
        %s975 = scalar_lea.vmem %s4, 32
        %v976 = vld [vmem:[%s975] sm:$0xff]
        %v977 = vld [vmem:[%s975 + $0x8] sm:$0xff]
        %979 = vset.pattern.permute.xlu0 0
        %980 = vperm.xlu0 %979, %v976
        %v981 = vpop.permute.xlu0 %980
        %984 = vset.pattern.permute.xlu0 0
        %985 = vperm.xlu0 %984, %v977
        %v986 = vpop.permute.xlu0 %985
        %v990 = vunpack.c.l.b16 %v973
        %v991 = vunpack.c.l.b16 %v974
        %v992 = vpack.c.b16 %v991, %v990
        %v994 = vsel %vm500, %v992, 0
        %996 = vmatprep.subr.bf16.mxu0 0
        %997 = vmatpush1.bf16.msra.mxu0 %v819
        %998 = vmatprep.subr.bf16.mxu0 0
        %999 = vmatpush1.bf16.msra.mxu0 0
        %1000 = vmatprep.subr.bf16.mxu0 0
        %1001 = vmatpush1.bf16.msra.mxu0 0
        %1002 = vmatprep.subr.bf16.mxu0 0
        %1003 = vmatpush1.bf16.msra.mxu0 0
        %1004 = vmatprep.subr.bf16.mxu0 0
        %1005 = vmatpush1.bf16.msra.mxu0 0
        %1006 = vmatprep.subr.bf16.mxu0 0
        %1007 = vmatpush1.bf16.msra.mxu0 0
        %1008 = vmatprep.subr.bf16.mxu0 0
        %1009 = vmatpush1.bf16.msra.mxu0 0
        %1010 = vmatprep.subr.bf16.mxu0 0
        %1011 = vmatpush1.bf16.msra.mxu0 0
        %1012 = vmatprep.subr.bf16.mxu0 0
        %1013 = vmatpush1.bf16.msra.mxu0 0
        %1014 = vmatprep.subr.bf16.mxu0 0
        %1015 = vmatpush1.bf16.msra.mxu0 0
        %1016 = vmatprep.subr.bf16.mxu0 0
        %1017 = vmatpush1.bf16.msra.mxu0 0
        %1018 = vmatprep.subr.bf16.mxu0 0
        %1019 = vmatpush1.bf16.msra.mxu0 0
        %1020 = vmatprep.subr.bf16.mxu0 0
        %1021 = vmatpush1.bf16.msra.mxu0 0
        %1022 = vmatprep.subr.bf16.mxu0 0
        %1023 = vmatpush1.bf16.msra.mxu0 0
        %1024 = vmatprep.subr.bf16.mxu0 0
        %1025 = vmatpush1.bf16.msra.mxu0 0
        %1026 = vmatprep.subr.bf16.mxu0 0
        %1027 = vmatpush1.bf16.msra.mxu0 0
        %1028 = vmatprep.mubr.bf16.mxu0 0
        %1029 = vmatmul.mubr.bf16.gmra.mrb[0].mxu0 %v994
        %v1030 = vpop.f32.mrb[0].mxu0
        %v1031 = vadd.f32 %v981, %v1030
        %v1032 = vpop.f32.mrb[0].mxu0
        %v1033 = vpop.f32.mrb[0].mxu0
        %v1034 = vadd.f32 %v986, %v1033
        %v1035 = vpop.f32.mrb[0].mxu0
        %1036 = vdwg.mxu0
        %v1037 = vadd.f32 %v970, %v1031
        %v1038 = vadd.f32 %v971, %v1034
        %v1039 = vmax.f32 %v1037, 0.0
        %v1040 = vmax.f32 %v1038, 0.0
        %1041 = vrot.lane.b32.xlu0 %v1039, 2
        %v1042 = vpop.permute.xlu0 %1041
        %1043 = vrot.lane.b32.xlu0 %v1040, 2
        %v1044 = vpop.permute.xlu0 %1043
        %s1045 = scalar_lea.vmem [#allocation2], 96
        %v1046 = vld [vmem:[%s1045] sm:$0xff]
        %v1047 = vld [vmem:[%s1045 + $0x8] sm:$0xff]
        %v1048 = vsel %vm556, %v1046, %v1042
        %v1049 = vsel %vm556, %v1047, %v1044
        %1052 = vrot.lane.b32.xlu0 %v1039, 2
        %v1053 = vpop.permute.xlu0 %1052
        %1054 = vrot.lane.b32.xlu0 %v1040, 2
        %v1055 = vpop.permute.xlu0 %1054
        %1058 = vst.msk [vmem:[%s1045] sm:$0xff] %vm567, %v1053
        %1059 = vst.msk [vmem:[%s1045 + $0x8] sm:$0xff] %vm567, %v1055
        %s1060 = scalar_lea.vmem %s1, 48
        %v1061 = vld [vmem:[%s1060] sm:$0xf]
        %v1062 = vld [vmem:[%s1060 + $0x4] sm:$0xf]
        %v1063 = vpack.c.bf16 %v1049, %v1048
        %v1064 = vpack.c.bf16 %v1040, %v1039
        %s1065 = scalar_lea.vmem %s2, 96
        %v1066 = vld [vmem:[%s1065] sm:$0xff]
        %v1067 = vld [vmem:[%s1065 + $0x8] sm:$0xff]
        %1069 = vset.pattern.permute.xlu0 0
        %1070 = vperm.xlu0 %1069, %v1066
        %v1071 = vpop.permute.xlu0 %1070
        %1074 = vset.pattern.permute.xlu0 0
        %1075 = vperm.xlu0 %1074, %v1067
        %v1076 = vpop.permute.xlu0 %1075
        %v1080 = vunpack.c.l.b16 %v1061
        %v1081 = vunpack.c.l.b16 %v1062
        %v1082 = vpack.c.b16 %v1081, %v1080
        %v1084 = vsel %vm346, %v1082, 0
        %1086 = vmatprep.subr.bf16.mxu0 0
        %1087 = vmatpush1.bf16.msra.mxu0 %v1063
        %1088 = vmatprep.subr.bf16.mxu0 0
        %1089 = vmatpush1.bf16.msra.mxu0 %v1064
        %1090 = vmatprep.subr.bf16.mxu0 0
        %1091 = vmatpush1.bf16.msra.mxu0 0
        %1092 = vmatprep.subr.bf16.mxu0 0
        %1093 = vmatpush1.bf16.msra.mxu0 0
        %1094 = vmatprep.subr.bf16.mxu0 0
        %1095 = vmatpush1.bf16.msra.mxu0 0
        %1096 = vmatprep.subr.bf16.mxu0 0
        %1097 = vmatpush1.bf16.msra.mxu0 0
        %1098 = vmatprep.subr.bf16.mxu0 0
        %1099 = vmatpush1.bf16.msra.mxu0 0
        %1100 = vmatprep.subr.bf16.mxu0 0
        %1101 = vmatpush1.bf16.msra.mxu0 0
        %1102 = vmatprep.subr.bf16.mxu0 0
        %1103 = vmatpush1.bf16.msra.mxu0 0
        %1104 = vmatprep.subr.bf16.mxu0 0
        %1105 = vmatpush1.bf16.msra.mxu0 0
        %1106 = vmatprep.subr.bf16.mxu0 0
        %1107 = vmatpush1.bf16.msra.mxu0 0
        %1108 = vmatprep.subr.bf16.mxu0 0
        %1109 = vmatpush1.bf16.msra.mxu0 0
        %1110 = vmatprep.subr.bf16.mxu0 0
        %1111 = vmatpush1.bf16.msra.mxu0 0
        %1112 = vmatprep.subr.bf16.mxu0 0
        %1113 = vmatpush1.bf16.msra.mxu0 0
        %1114 = vmatprep.subr.bf16.mxu0 0
        %1115 = vmatpush1.bf16.msra.mxu0 0
        %1116 = vmatprep.subr.bf16.mxu0 0
        %1117 = vmatpush1.bf16.msra.mxu0 0
        %1118 = vmatprep.mubr.bf16.mxu0 0
        %1119 = vmatmul.mubr.bf16.gmra.mrb[0].mxu0 %v1084
        %v1120 = vpop.f32.mrb[0].mxu0
        %v1121 = vadd.f32 %v1071, %v1120
        %v1122 = vpop.f32.mrb[0].mxu0
        %v1123 = vpop.f32.mrb[0].mxu0
        %v1124 = vadd.f32 %v1076, %v1123
        %v1125 = vpop.f32.mrb[0].mxu0
        %1126 = vdwg.mxu0
        %v1127 = vmax.f32 %v1121, 0.0
        %v1128 = vmax.f32 %v1124, 0.0
        %1129 = vrot.lane.b32.xlu0 %v1127, 2
        %v1130 = vpop.permute.xlu0 %1129
        %1131 = vrot.lane.b32.xlu0 %v1128, 2
        %v1132 = vpop.permute.xlu0 %1131
        %s1133 = scalar_lea.vmem [#allocation2], 112
        %v1134 = vld [vmem:[%s1133] sm:$0xff]
        %v1135 = vld [vmem:[%s1133 + $0x8] sm:$0xff]
        %v1136 = vsel %vm556, %v1134, %v1130
        %v1137 = vsel %vm556, %v1135, %v1132
        %1140 = vrot.lane.b32.xlu0 %v1127, 2
        %v1141 = vpop.permute.xlu0 %1140
        %1142 = vrot.lane.b32.xlu0 %v1128, 2
        %v1143 = vpop.permute.xlu0 %1142
        %1146 = vst.msk [vmem:[%s1133] sm:$0xff] %vm567, %v1141
        %1147 = vst.msk [vmem:[%s1133 + $0x8] sm:$0xff] %vm567, %v1143
        %s1148 = scalar_lea.vmem %s1, 56
        %v1149 = vld [vmem:[%s1148] sm:$0xf]
        %v1150 = vld [vmem:[%s1148 + $0x4] sm:$0xf]
        %v1151 = vpack.c.bf16 %v1137, %v1136
        %v1152 = vpack.c.bf16 %v1128, %v1127
        %s1153 = scalar_lea.vmem %s2, 112
        %v1154 = vld [vmem:[%s1153] sm:$0xff]
        %v1155 = vld [vmem:[%s1153 + $0x8] sm:$0xff]
        %1157 = vset.pattern.permute.xlu0 0
        %1158 = vperm.xlu0 %1157, %v1154
        %v1159 = vpop.permute.xlu0 %1158
        %1162 = vset.pattern.permute.xlu0 0
        %1163 = vperm.xlu0 %1162, %v1155
        %v1164 = vpop.permute.xlu0 %1163
        %v1167 = vunpack.c.l.b16 %v1149
        %v1168 = vunpack.c.l.b16 %v1150
        %v1169 = vpack.c.b16 %v1168, %v1167
        %v1171 = vsel %vm346, %v1169, 0
        %1173 = vmatprep.subr.bf16.mxu0 0
        %1174 = vmatpush1.bf16.msra.mxu0 %v1151
        %1175 = vmatprep.subr.bf16.mxu0 0
        %1176 = vmatpush1.bf16.msra.mxu0 %v1152
        %1177 = vmatprep.subr.bf16.mxu0 0
        %1178 = vmatpush1.bf16.msra.mxu0 0
        %1179 = vmatprep.subr.bf16.mxu0 0
        %1180 = vmatpush1.bf16.msra.mxu0 0
        %1181 = vmatprep.subr.bf16.mxu0 0
        %1182 = vmatpush1.bf16.msra.mxu0 0
        %1183 = vmatprep.subr.bf16.mxu0 0
        %1184 = vmatpush1.bf16.msra.mxu0 0
        %1185 = vmatprep.subr.bf16.mxu0 0
        %1186 = vmatpush1.bf16.msra.mxu0 0
        %1187 = vmatprep.subr.bf16.mxu0 0
        %1188 = vmatpush1.bf16.msra.mxu0 0
        %1189 = vmatprep.subr.bf16.mxu0 0
        %1190 = vmatpush1.bf16.msra.mxu0 0
        %1191 = vmatprep.subr.bf16.mxu0 0
        %1192 = vmatpush1.bf16.msra.mxu0 0
        %1193 = vmatprep.subr.bf16.mxu0 0
        %1194 = vmatpush1.bf16.msra.mxu0 0
        %1195 = vmatprep.subr.bf16.mxu0 0
        %1196 = vmatpush1.bf16.msra.mxu0 0
        %1197 = vmatprep.subr.bf16.mxu0 0
        %1198 = vmatpush1.bf16.msra.mxu0 0
        %1199 = vmatprep.subr.bf16.mxu0 0
        %1200 = vmatpush1.bf16.msra.mxu0 0
        %1201 = vmatprep.subr.bf16.mxu0 0
        %1202 = vmatpush1.bf16.msra.mxu0 0
        %1203 = vmatprep.subr.bf16.mxu0 0
        %1204 = vmatpush1.bf16.msra.mxu0 0
        %1205 = vmatprep.mubr.bf16.mxu0 0
        %1206 = vmatmul.mubr.bf16.gmra.mrb[0].mxu0 %v1171
        %v1207 = vpop.f32.mrb[0].mxu0
        %v1208 = vadd.f32 %v1159, %v1207
        %v1209 = vpop.f32.mrb[0].mxu0
        %v1210 = vpop.f32.mrb[0].mxu0
        %v1211 = vpop.f32.mrb[0].mxu0
        %1212 = vdwg.mxu0
        %v1213 = vmax.f32 %v1208, 0.0
        %s1214 = scalar_lea.vmem %s3, 24
        %v1215 = vld [vmem:[%s1214] sm:$0xf]
        %v1216 = vld [vmem:[%s1214 + $0x4] sm:$0xf]
        %s1217 = scalar_lea.vmem %s4, 48
        %v1218 = vld [vmem:[%s1217] sm:$0xff]
        %v1219 = vld [vmem:[%s1217 + $0x8] sm:$0xff]
        %1221 = vset.pattern.permute.xlu0 0
        %1222 = vperm.xlu0 %1221, %v1218
        %v1223 = vpop.permute.xlu0 %1222
        %1226 = vset.pattern.permute.xlu0 0
        %1227 = vperm.xlu0 %1226, %v1219
        %v1228 = vpop.permute.xlu0 %1227
        %v1231 = vunpack.c.l.b16 %v1215
        %v1232 = vunpack.c.l.b16 %v1216
        %v1233 = vpack.c.b16 %v1232, %v1231
        %v1235 = vsel %vm500, %v1233, 0
        %1237 = vmatprep.subr.bf16.mxu0 0
        %1238 = vmatpush1.bf16.msra.mxu0 %v1064
        %1239 = vmatprep.subr.bf16.mxu0 0
        %1240 = vmatpush1.bf16.msra.mxu0 0
        %1241 = vmatprep.subr.bf16.mxu0 0
        %1242 = vmatpush1.bf16.msra.mxu0 0
        %1243 = vmatprep.subr.bf16.mxu0 0
        %1244 = vmatpush1.bf16.msra.mxu0 0
        %1245 = vmatprep.subr.bf16.mxu0 0
        %1246 = vmatpush1.bf16.msra.mxu0 0
        %1247 = vmatprep.subr.bf16.mxu0 0
        %1248 = vmatpush1.bf16.msra.mxu0 0
        %1249 = vmatprep.subr.bf16.mxu0 0
        %1250 = vmatpush1.bf16.msra.mxu0 0
        %1251 = vmatprep.subr.bf16.mxu0 0
        %1252 = vmatpush1.bf16.msra.mxu0 0
        %1253 = vmatprep.subr.bf16.mxu0 0
        %1254 = vmatpush1.bf16.msra.mxu0 0
        %1255 = vmatprep.subr.bf16.mxu0 0
        %1256 = vmatpush1.bf16.msra.mxu0 0
        %1257 = vmatprep.subr.bf16.mxu0 0
        %1258 = vmatpush1.bf16.msra.mxu0 0
        %1259 = vmatprep.subr.bf16.mxu0 0
        %1260 = vmatpush1.bf16.msra.mxu0 0
        %1261 = vmatprep.subr.bf16.mxu0 0
        %1262 = vmatpush1.bf16.msra.mxu0 0
        %1263 = vmatprep.subr.bf16.mxu0 0
        %1264 = vmatpush1.bf16.msra.mxu0 0
        %1265 = vmatprep.subr.bf16.mxu0 0
        %1266 = vmatpush1.bf16.msra.mxu0 0
        %1267 = vmatprep.subr.bf16.mxu0 0
        %1268 = vmatpush1.bf16.msra.mxu0 0
        %1269 = vmatprep.mubr.bf16.mxu0 0
        %1270 = vmatmul.mubr.bf16.gmra.mrb[0].mxu0 %v1235
        %v1271 = vpop.f32.mrb[0].mxu0
        %v1272 = vadd.f32 %v1223, %v1271
        %v1273 = vpop.f32.mrb[0].mxu0
        %v1274 = vpop.f32.mrb[0].mxu0
        %v1275 = vpop.f32.mrb[0].mxu0
        %1276 = vdwg.mxu0
        %v1277 = vadd.f32 %v1213, %v1272
        %v1278 = vmax.f32 %v1277, 0.0
        %1279 = vst [vmem:[%s278] sm:$0xf] %v1278
        %s1280 = sand.u32 %s153, 1
        %s1281 = scalar_lea.sflag [#allocation5], %s1280
        %s1282 = sand.u32 %s153, 1
        %s1283 = smul.addr %s1282, 4
        %s1284 = scalar_lea.vmem [#allocation4], %s1283
        // Predicated region
        $region83: #{tpu_custom_call.1} parent=73 // pred_check
          %p1285 = pneg %p163
        $region84: #{tpu_custom_call.1} parent=73 // pred_check_branch
          %1287 = sbr.rel (%p1285) target = $region86
        $region85: #{tpu_custom_call.1} parent=73 // pred_region
          %s1289 = ssub.s32 64, 64
          %1290 = vsyncadd %s1281, %s1289
          %s1291 = smul.addr %s23, 2
          %s1292 = sadd.s32 %s24, %s1291
          %s1293 = smul.addr %s1292, 64
          %s1294 = scalar_lea.hbm %s5, %s1293
          %s1296 = sshll.u32 %s1284, 4
          %s1297 = int_to_ptr.vmem [resolvable:$true] %s1296
          %1299 = dma.vmem_to_hbm [thread:$0]  %s1297, 64, %s1294, %s1281
        $region86: #{tpu_custom_call.1} parent=73 // pred_fallthru
          _
      $region74: #{tpu_custom_call.1} parent=5 // pred_fallthru
        _
      %p1300 = scmp.le.s32.totalorder 2, %s14
      // Predicated region
      $region87: #{tpu_custom_call.1} parent=5 // pred_check
        %p1301 = pneg %p1300
      $region88: #{tpu_custom_call.1} parent=5 // pred_check_branch
        %1303 = sbr.rel (%p1301) target = $region90
      $region89: #{tpu_custom_call.1} parent=5 // pred_region
        %s1304 = ssub.s32 %s14, 2
        // Predicated region
        $region91: #{tpu_custom_call.1} parent=89 // pred_check
          %p1305 = pneg %p169
        $region92: #{tpu_custom_call.1} parent=89 // pred_check_branch
          %1307 = sbr.rel (%p1305) target = $region94
        $region93: #{tpu_custom_call.1} parent=89 // pred_region
          %s1308 = sand.u32 %s154, 1
          %s1309 = scalar_lea.sflag [#allocation5], %s1308
          %s1310 = sand.u32 %s154, 1
          %s1311 = smul.addr %s1310, 4
          %s1312 = scalar_lea.vmem [#allocation4], %s1311
          %1313 = dma.done %s1309, 64
        $region94: #{tpu_custom_call.1} parent=89 // pred_fallthru
          _
      $region90: #{tpu_custom_call.1} parent=5 // pred_fallthru
        _
    $region6: #{tpu_custom_call.1} parent=1 // loop_footer
      %s18 = sadd.s32 1, %s14
    $region7: #{tpu_custom_call.1} parent=1 // loop_footer_branch
      %13 = sbr.rel target = $region3
    $region8: #{tpu_custom_call.1} parent=1 // loop_exit
      _
    %1314 = vsyncpa [#allocation5], 1
    %s1315 = scalar_lea.sflag [#allocation5], 1
    %1316 = vsyncpa %s1315, 1

</llo_original>
